<compile_context>
chip_gen: v6e
topology: v6e:2x2x1
jax: 0.10.0
libtpu: 0.0.40
codegen_flags: <defaults>
</compile_context>

<pallas_src>
import jax
import jax.numpy as jnp
from jax import lax
from jax.experimental import pallas as pl
from jax.experimental.pallas import tpu as pltpu

INPUT_SIZE = 56
HIDDEN_SIZE = 64
FC_SIZE = 32
NUM_CLASSES = 6
LANE = 128
SUBLANE = 8


def _lstm_kernel(x_ref, wih_ref, whh_ref, b_ref,
                 wfc_ref, bfc_ref, wfc2_ref, bfc2_ref,
                 out_ref, gx_ref):
    TB, _ = x_ref.shape
    B = out_ref.shape[0]          # padded batch (8)
    T = TB // B
    Hp = whh_ref.shape[0]         # padded hidden (128)

    # (1)(3) Hoisted input projection: all T timesteps in one f32 MXU matmul
    # (no recurrent dependency -> off the critical path), bias folded in,
    # staged to VMEM scratch so the unrolled recurrence only reloads 4 vregs
    # per step instead of keeping ~32 vregs live across the whole loop.
    gx_ref[...] = (jnp.dot(x_ref[...], wih_ref[...],
                           preferred_element_type=jnp.float32)
                   + b_ref[...])

    def sig(v):
        # (4) EUP-only sigmoid (tanh form) -> no f32 VPU divide on the chain.
        return 0.5 * jnp.tanh(0.5 * v) + 0.5

    # h/c carried in vregs across a fully-unrolled static time loop (T=8),
    # so every slice below is static and the scheduler sees the whole chain.
    h = jnp.zeros((B, Hp), jnp.float32)
    c = jnp.zeros((B, Hp), jnp.float32)
    # TODO(synk): keep W_hh resident in the MXU across the unrolled steps via
    # pltpu.matmul_push_rhs / matmul_acc_lhs / matmul_pop if the bundle dump
    # shows Mosaic re-pushing the (128, 512) RHS every iteration.
    for t in range(T):
        # (1) bf16 operands on the serial recurrent matmul, f32 accumulation.
        hg = jnp.dot(h.astype(jnp.bfloat16), whh_ref[...],
                     preferred_element_type=jnp.float32)
        gates = gx_ref[pl.ds(t * B, B), :] + hg      # static slice, (B, 4*Hp)
        # (2) Each gate is a lane-offset-0 aligned (B, 128) vreg: no XLU
        # rotates / masked selects between gate slices and c / tanh(c).
        i = sig(gates[:, 0:Hp])
        f = sig(gates[:, Hp:2 * Hp])
        g = jnp.tanh(gates[:, 2 * Hp:3 * Hp])
        o = sig(gates[:, 3 * Hp:4 * Hp])
        c = f * c + i * g
        h = o * jnp.tanh(c)

    # (5) Head (one-shot tail, f32, lane-dense 128-wide): fc -> relu -> fc2.
    z = jnp.maximum(
        jnp.dot(h, wfc_ref[...], preferred_element_type=jnp.float32)
        + bfc_ref[...], 0.0)
    out_ref[...] = (jnp.dot(z, wfc2_ref[...],
                            preferred_element_type=jnp.float32)
                    + bfc2_ref[...]).astype(out_ref.dtype)


def _pad_gate_cols(w, H, Hp):
    """(..., 4H) -> (..., 4Hp): gate g's H real columns land at lane g*Hp."""
    out = jnp.zeros(w.shape[:-1] + (4 * Hp,), w.dtype)
    for g in range(4):
        out = out.at[..., g * Hp:g * Hp + H].set(w[..., g * H:(g + 1) * H])
    return out


def lstm_forward(x, params):
    """x: (B, T, D) float32. Returns (B, NUM_CLASSES) float32."""
    B, T, D = x.shape
    H = HIDDEN_SIZE
    Hp = LANE                                   # hidden padded to a full vreg lane width
    wih, whh, b, wfc, bfc, wfc2, bfc2 = params

    # (6) Pad batch to the 8-sublane granule; padded rows are zero.
    B_pad = max(SUBLANE, ((B + SUBLANE - 1) // SUBLANE) * SUBLANE)
    x_tbd = jnp.transpose(x, (1, 0, 2))                          # (T, B, D)
    x_pad = jnp.zeros((T, B_pad, D), jnp.float32).at[:, :B, :].set(x_tbd)
    x_flat = x_pad.reshape(T * B_pad, D)                         # (T*B_pad, D)

    # (2) Per-gate lane padding H -> 128; padded rows/cols are zero so padded
    # lanes of h and c stay exactly zero throughout the recurrence.
    wih_p = _pad_gate_cols(wih, H, Hp)                           # (D, 4*Hp)
    b_p = _pad_gate_cols(b, H, Hp)                               # (1, 4*Hp)
    whh_p = jnp.zeros((Hp, 4 * Hp), jnp.float32)
    whh_p = whh_p.at[:H, :].set(_pad_gate_cols(whh, H, Hp))
    whh_bf16 = whh_p.astype(jnp.bfloat16)                        # (1) bf16 MXU operand

    # (5) Lane-dense head: fc1 width 32 -> 128, classes 6 -> 128.
    wfc_p = jnp.zeros((Hp, LANE), jnp.float32).at[:H, :FC_SIZE].set(wfc)
    bfc_p = jnp.zeros((1, LANE), jnp.float32).at[:, :FC_SIZE].set(bfc)
    wfc2_p = jnp.zeros((LANE, LANE), jnp.float32).at[:FC_SIZE, :NUM_CLASSES].set(wfc2)
    bfc2_p = jnp.zeros((1, LANE), jnp.float32).at[:, :NUM_CLASSES].set(bfc2)

    full = lambda shape: pl.BlockSpec(shape, lambda s=shape: (0,) * len(s))

    out = pl.pallas_call(
        _lstm_kernel,
        out_shape=jax.ShapeDtypeStruct((B_pad, LANE), jnp.float32),
        in_specs=[
            full((T * B_pad, D)),
            full((D, 4 * Hp)),
            full((Hp, 4 * Hp)),
            full((1, 4 * Hp)),
            full((Hp, LANE)),
            full((1, LANE)),
            full((LANE, LANE)),
            full((1, LANE)),
        ],
        out_specs=full((B_pad, LANE)),
        scratch_shapes=[pltpu.VMEM((T * B_pad, 4 * Hp), jnp.float32)],
    )(x_flat, wih_p, whh_bf16, b_p, wfc_p, bfc_p, wfc2_p, bfc2_p)

    # TODO(synk): at large B add a batch-tile grid with
    # dimension_semantics=("parallel",) (uses both v7x TensorCores) and at
    # large T tile the hoisted gates over an "arbitrary" T axis with h/c in
    # VMEM scratch; pointless at B=2, T=8 where launch + serial-step latency
    # dominates and everything fits VMEM on all generations.
    return out[:B, :NUM_CLASSES]


def init_params(key):
    """Deterministic parameter init (uniform(-1/sqrt(H), 1/sqrt(H)) like PyTorch)."""
    H, D = HIDDEN_SIZE, INPUT_SIZE
    ks = jax.random.split(key, 8)
    s = 1.0 / jnp.sqrt(H)
    wih = jax.random.uniform(ks[0], (D, 4 * H), jnp.float32, -s, s)
    whh = jax.random.uniform(ks[1], (H, 4 * H), jnp.float32, -s, s)
    b_ih = jax.random.uniform(ks[2], (1, 4 * H), jnp.float32, -s, s)
    b_hh = jax.random.uniform(ks[3], (1, 4 * H), jnp.float32, -s, s)
    b = b_ih + b_hh  # combined LSTM bias
    s1 = 1.0 / jnp.sqrt(H)
    wfc = jax.random.uniform(ks[4], (H, FC_SIZE), jnp.float32, -s1, s1)
    bfc = jax.random.uniform(ks[5], (1, FC_SIZE), jnp.float32, -s1, s1)
    s2 = 1.0 / jnp.sqrt(FC_SIZE)
    wfc2 = jax.random.uniform(ks[6], (FC_SIZE, NUM_CLASSES), jnp.float32, -s2, s2)
    bfc2 = jax.random.uniform(ks[7], (1, NUM_CLASSES), jnp.float32, -s2, s2)
    return (wih, whh, b, wfc, bfc, wfc2, bfc2)


def reference_forward(x, params):
    """Pure-JAX f32 reference matching PyTorch nn.LSTM semantics (gate order i,f,g,o)."""
    wih, whh, b, wfc, bfc, wfc2, bfc2 = params
    B, T, D = x.shape
    H = HIDDEN_SIZE
    h = jnp.zeros((B, H), jnp.float32)
    c = jnp.zeros((B, H), jnp.float32)

    def step(carry, x_t):
        h, c = carry
        gates = x_t @ wih + h @ whh + b
        i = jax.nn.sigmoid(gates[:, 0:H])
        f = jax.nn.sigmoid(gates[:, H:2 * H])
        g = jnp.tanh(gates[:, 2 * H:3 * H])
        o = jax.nn.sigmoid(gates[:, 3 * H:4 * H])
        c = f * c + i * g
        h = o * jnp.tanh(c)
        return (h, c), None

    (h, c), _ = lax.scan(step, (h, c), jnp.transpose(x, (1, 0, 2)))
    z = jnp.maximum(h @ wfc + bfc, 0.0)
    return z @ wfc2 + bfc2


if __name__ == "__main__":
    key = jax.random.PRNGKey(0)
    k_x, k_p = jax.random.split(key)

    B, T = 2, 8
    x = jax.random.normal(k_x, (B, T, INPUT_SIZE), jnp.float32)
    params = init_params(k_p)

    out = jax.jit(lstm_forward)(x, params)
    out = jax.block_until_ready(out)

    ref = reference_forward(x, params)
    assert out.shape == (B, NUM_CLASSES)
    # bf16 MXU operands on the recurrent matmul -> tolerance loosened vs the
    # pure-f32 reference (typical |err| ~ 2-3e-3 at these weight scales).
    assert jnp.allclose(out, ref, atol=2e-2, rtol=2e-2), (
        float(jnp.max(jnp.abs(out - ref))))

    print("KERNEL_OK")
</pallas_src>

<mosaic_0001>
module attributes {stable_mosaic.version = 11 : i64} {
  func.func @_lstm_kernel(%arg0: memref<64x56xf32, #tpu.memory_space<vmem>>, %arg1: memref<56x512xf32, #tpu.memory_space<vmem>>, %arg2: memref<128x512xbf16, #tpu.memory_space<vmem>>, %arg3: memref<1x512xf32, #tpu.memory_space<vmem>>, %arg4: memref<128x128xf32, #tpu.memory_space<vmem>>, %arg5: memref<1x128xf32, #tpu.memory_space<vmem>>, %arg6: memref<128x128xf32, #tpu.memory_space<vmem>>, %arg7: memref<1x128xf32, #tpu.memory_space<vmem>>, %arg8: memref<8x128xf32, #tpu.memory_space<vmem>>, %arg9: memref<64x512xf32, #tpu.memory_space<vmem>>) attributes {dimension_semantics = [], scalar_prefetch = 0 : i64, scratch_operands = 1 : i64, tpu.core_type = #tpu.core_type<tc>} {
    %c0 = arith.constant 0 : index
    %c0_0 = arith.constant 0 : index
    %0 = vector.load %arg0[%c0, %c0_0] : memref<64x56xf32, #tpu.memory_space<vmem>>, vector<64x56xf32>
    %c0_1 = arith.constant 0 : index
    %c0_2 = arith.constant 0 : index
    %1 = vector.load %arg1[%c0_1, %c0_2] : memref<56x512xf32, #tpu.memory_space<vmem>>, vector<56x512xf32>
    %cst = arith.constant dense<0.000000e+00> : vector<64x512xf32>
    %2 = tpu.matmul %0, %1, %cst {dimension_numbers = #tpu.dot_dimension_numbers<[1], [0], [0], [1], [0, 0, 1, 1], [], []>} : vector<64x56xf32>, vector<56x512xf32>, vector<64x512xf32> -> vector<64x512xf32>
    %c0_3 = arith.constant 0 : index
    %c0_4 = arith.constant 0 : index
    %3 = vector.load %arg3[%c0_3, %c0_4] : memref<1x512xf32, #tpu.memory_space<vmem>>, vector<1x512xf32>
    %4 = vector.broadcast %3 : vector<1x512xf32> to vector<64x512xf32>
    %5 = arith.addf %2, %4 : vector<64x512xf32>
    %c0_5 = arith.constant 0 : index
    %c0_6 = arith.constant 0 : index
    %6 = vector.load %arg9[%c0_5, %c0_6] : memref<64x512xf32, #tpu.memory_space<vmem>>, vector<64x512xf32>
    tpu.vector_store %arg9[%c0_5, %c0_6], %5 {strides = array<i32>} : memref<64x512xf32, #tpu.memory_space<vmem>>, vector<64x512xf32>,
    %cst_7 = arith.constant 0.000000e+00 : f32
    %7 = vector.broadcast %cst_7 : f32 to vector<8x128xf32>
    %cst_8 = arith.constant 0.000000e+00 : f32
    %8 = vector.broadcast %cst_8 : f32 to vector<8x128xf32>
    %9 = arith.truncf %7 : vector<8x128xf32> to vector<8x128xbf16>
    %c0_9 = arith.constant 0 : index
    %c0_10 = arith.constant 0 : index
    %10 = vector.load %arg2[%c0_9, %c0_10] : memref<128x512xbf16, #tpu.memory_space<vmem>>, vector<128x512xbf16>
    %cst_11 = arith.constant dense<0.000000e+00> : vector<8x512xf32>
    %11 = tpu.matmul %9, %10, %cst_11 {dimension_numbers = #tpu.dot_dimension_numbers<[1], [0], [0], [1], [0, 0, 1, 1], [], []>} : vector<8x128xbf16>, vector<128x512xbf16>, vector<8x512xf32> -> vector<8x512xf32>
    %c0_12 = arith.constant 0 : index
    %c0_13 = arith.constant 0 : index
    %12 = vector.load %arg9[%c0_12, %c0_13] : memref<64x512xf32, #tpu.memory_space<vmem>>, vector<8x512xf32>
    %13 = arith.addf %12, %11 : vector<8x512xf32>
    %14 = vector.extract_strided_slice %13 {offsets = [0, 0], sizes = [8, 128], strides = [1, 1]} : vector<8x512xf32> to vector<8x128xf32>
    %cst_14 = arith.constant 5.000000e-01 : f32
    %15 = vector.broadcast %cst_14 : f32 to vector<8x128xf32>
    %16 = arith.mulf %15, %14 : vector<8x128xf32>
    %17 = math.tanh %16 : vector<8x128xf32>
    %cst_15 = arith.constant 5.000000e-01 : f32
    %18 = vector.broadcast %cst_15 : f32 to vector<8x128xf32>
    %19 = arith.mulf %18, %17 : vector<8x128xf32>
    %cst_16 = arith.constant 5.000000e-01 : f32
    %20 = vector.broadcast %cst_16 : f32 to vector<8x128xf32>
    %21 = arith.addf %19, %20 : vector<8x128xf32>
    %22 = vector.extract_strided_slice %13 {offsets = [0, 128], sizes = [8, 128], strides = [1, 1]} : vector<8x512xf32> to vector<8x128xf32>
    %cst_17 = arith.constant 5.000000e-01 : f32
    %23 = vector.broadcast %cst_17 : f32 to vector<8x128xf32>
    %24 = arith.mulf %23, %22 : vector<8x128xf32>
    %25 = math.tanh %24 : vector<8x128xf32>
    %cst_18 = arith.constant 5.000000e-01 : f32
    %26 = vector.broadcast %cst_18 : f32 to vector<8x128xf32>
    %27 = arith.mulf %26, %25 : vector<8x128xf32>
    %cst_19 = arith.constant 5.000000e-01 : f32
    %28 = vector.broadcast %cst_19 : f32 to vector<8x128xf32>
    %29 = arith.addf %27, %28 : vector<8x128xf32>
    %30 = vector.extract_strided_slice %13 {offsets = [0, 256], sizes = [8, 128], strides = [1, 1]} : vector<8x512xf32> to vector<8x128xf32>
    %31 = math.tanh %30 : vector<8x128xf32>
    %32 = vector.extract_strided_slice %13 {offsets = [0, 384], sizes = [8, 128], strides = [1, 1]} : vector<8x512xf32> to vector<8x128xf32>
    %cst_20 = arith.constant 5.000000e-01 : f32
    %33 = vector.broadcast %cst_20 : f32 to vector<8x128xf32>
    %34 = arith.mulf %33, %32 : vector<8x128xf32>
    %35 = math.tanh %34 : vector<8x128xf32>
    %cst_21 = arith.constant 5.000000e-01 : f32
    %36 = vector.broadcast %cst_21 : f32 to vector<8x128xf32>
    %37 = arith.mulf %36, %35 : vector<8x128xf32>
    %cst_22 = arith.constant 5.000000e-01 : f32
    %38 = vector.broadcast %cst_22 : f32 to vector<8x128xf32>
    %39 = arith.addf %37, %38 : vector<8x128xf32>
    %40 = arith.mulf %29, %8 : vector<8x128xf32>
    %41 = arith.mulf %21, %31 : vector<8x128xf32>
    %42 = arith.addf %40, %41 : vector<8x128xf32>
    %43 = math.tanh %42 : vector<8x128xf32>
    %44 = arith.mulf %39, %43 : vector<8x128xf32>
    %45 = arith.truncf %44 : vector<8x128xf32> to vector<8x128xbf16>
    %c0_23 = arith.constant 0 : index
    %c0_24 = arith.constant 0 : index
    %46 = vector.load %arg2[%c0_23, %c0_24] : memref<128x512xbf16, #tpu.memory_space<vmem>>, vector<128x512xbf16>
    %cst_25 = arith.constant dense<0.000000e+00> : vector<8x512xf32>
    %47 = tpu.matmul %45, %46, %cst_25 {dimension_numbers = #tpu.dot_dimension_numbers<[1], [0], [0], [1], [0, 0, 1, 1], [], []>} : vector<8x128xbf16>, vector<128x512xbf16>, vector<8x512xf32> -> vector<8x512xf32>
    %c8 = arith.constant 8 : index
    %c0_26 = arith.constant 0 : index
    %48 = vector.load %arg9[%c8, %c0_26] : memref<64x512xf32, #tpu.memory_space<vmem>>, vector<8x512xf32>
    %49 = arith.addf %48, %47 : vector<8x512xf32>
    %50 = vector.extract_strided_slice %49 {offsets = [0, 0], sizes = [8, 128], strides = [1, 1]} : vector<8x512xf32> to vector<8x128xf32>
    %cst_27 = arith.constant 5.000000e-01 : f32
    %51 = vector.broadcast %cst_27 : f32 to vector<8x128xf32>
    %52 = arith.mulf %51, %50 : vector<8x128xf32>
    %53 = math.tanh %52 : vector<8x128xf32>
    %cst_28 = arith.constant 5.000000e-01 : f32
    %54 = vector.broadcast %cst_28 : f32 to vector<8x128xf32>
    %55 = arith.mulf %54, %53 : vector<8x128xf32>
    %cst_29 = arith.constant 5.000000e-01 : f32
    %56 = vector.broadcast %cst_29 : f32 to vector<8x128xf32>
    %57 = arith.addf %55, %56 : vector<8x128xf32>
    %58 = vector.extract_strided_slice %49 {offsets = [0, 128], sizes = [8, 128], strides = [1, 1]} : vector<8x512xf32> to vector<8x128xf32>
    %cst_30 = arith.constant 5.000000e-01 : f32
    %59 = vector.broadcast %cst_30 : f32 to vector<8x128xf32>
    %60 = arith.mulf %59, %58 : vector<8x128xf32>
    %61 = math.tanh %60 : vector<8x128xf32>
    %cst_31 = arith.constant 5.000000e-01 : f32
    %62 = vector.broadcast %cst_31 : f32 to vector<8x128xf32>
    %63 = arith.mulf %62, %61 : vector<8x128xf32>
    %cst_32 = arith.constant 5.000000e-01 : f32
    %64 = vector.broadcast %cst_32 : f32 to vector<8x128xf32>
    %65 = arith.addf %63, %64 : vector<8x128xf32>
    %66 = vector.extract_strided_slice %49 {offsets = [0, 256], sizes = [8, 128], strides = [1, 1]} : vector<8x512xf32> to vector<8x128xf32>
    %67 = math.tanh %66 : vector<8x128xf32>
    %68 = vector.extract_strided_slice %49 {offsets = [0, 384], sizes = [8, 128], strides = [1, 1]} : vector<8x512xf32> to vector<8x128xf32>
    %cst_33 = arith.constant 5.000000e-01 : f32
    %69 = vector.broadcast %cst_33 : f32 to vector<8x128xf32>
    %70 = arith.mulf %69, %68 : vector<8x128xf32>
    %71 = math.tanh %70 : vector<8x128xf32>
    %cst_34 = arith.constant 5.000000e-01 : f32
    %72 = vector.broadcast %cst_34 : f32 to vector<8x128xf32>
    %73 = arith.mulf %72, %71 : vector<8x128xf32>
    %cst_35 = arith.constant 5.000000e-01 : f32
    %74 = vector.broadcast %cst_35 : f32 to vector<8x128xf32>
    %75 = arith.addf %73, %74 : vector<8x128xf32>
    %76 = arith.mulf %65, %42 : vector<8x128xf32>
    %77 = arith.mulf %57, %67 : vector<8x128xf32>
    %78 = arith.addf %76, %77 : vector<8x128xf32>
    %79 = math.tanh %78 : vector<8x128xf32>
    %80 = arith.mulf %75, %79 : vector<8x128xf32>
    %81 = arith.truncf %80 : vector<8x128xf32> to vector<8x128xbf16>
    %c0_36 = arith.constant 0 : index
    %c0_37 = arith.constant 0 : index
    %82 = vector.load %arg2[%c0_36, %c0_37] : memref<128x512xbf16, #tpu.memory_space<vmem>>, vector<128x512xbf16>
    %cst_38 = arith.constant dense<0.000000e+00> : vector<8x512xf32>
    %83 = tpu.matmul %81, %82, %cst_38 {dimension_numbers = #tpu.dot_dimension_numbers<[1], [0], [0], [1], [0, 0, 1, 1], [], []>} : vector<8x128xbf16>, vector<128x512xbf16>, vector<8x512xf32> -> vector<8x512xf32>
    %c16 = arith.constant 16 : index
    %c0_39 = arith.constant 0 : index
    %84 = vector.load %arg9[%c16, %c0_39] : memref<64x512xf32, #tpu.memory_space<vmem>>, vector<8x512xf32>
    %85 = arith.addf %84, %83 : vector<8x512xf32>
    %86 = vector.extract_strided_slice %85 {offsets = [0, 0], sizes = [8, 128], strides = [1, 1]} : vector<8x512xf32> to vector<8x128xf32>
    %cst_40 = arith.constant 5.000000e-01 : f32
    %87 = vector.broadcast %cst_40 : f32 to vector<8x128xf32>
    %88 = arith.mulf %87, %86 : vector<8x128xf32>
    %89 = math.tanh %88 : vector<8x128xf32>
    %cst_41 = arith.constant 5.000000e-01 : f32
    %90 = vector.broadcast %cst_41 : f32 to vector<8x128xf32>
    %91 = arith.mulf %90, %89 : vector<8x128xf32>
    %cst_42 = arith.constant 5.000000e-01 : f32
    %92 = vector.broadcast %cst_42 : f32 to vector<8x128xf32>
    %93 = arith.addf %91, %92 : vector<8x128xf32>
    %94 = vector.extract_strided_slice %85 {offsets = [0, 128], sizes = [8, 128], strides = [1, 1]} : vector<8x512xf32> to vector<8x128xf32>
    %cst_43 = arith.constant 5.000000e-01 : f32
    %95 = vector.broadcast %cst_43 : f32 to vector<8x128xf32>
    %96 = arith.mulf %95, %94 : vector<8x128xf32>
    %97 = math.tanh %96 : vector<8x128xf32>
    %cst_44 = arith.constant 5.000000e-01 : f32
    %98 = vector.broadcast %cst_44 : f32 to vector<8x128xf32>
    %99 = arith.mulf %98, %97 : vector<8x128xf32>
    %cst_45 = arith.constant 5.000000e-01 : f32
    %100 = vector.broadcast %cst_45 : f32 to vector<8x128xf32>
    %101 = arith.addf %99, %100 : vector<8x128xf32>
    %102 = vector.extract_strided_slice %85 {offsets = [0, 256], sizes = [8, 128], strides = [1, 1]} : vector<8x512xf32> to vector<8x128xf32>
    %103 = math.tanh %102 : vector<8x128xf32>
    %104 = vector.extract_strided_slice %85 {offsets = [0, 384], sizes = [8, 128], strides = [1, 1]} : vector<8x512xf32> to vector<8x128xf32>
    %cst_46 = arith.constant 5.000000e-01 : f32
    %105 = vector.broadcast %cst_46 : f32 to vector<8x128xf32>
    %106 = arith.mulf %105, %104 : vector<8x128xf32>
    %107 = math.tanh %106 : vector<8x128xf32>
    %cst_47 = arith.constant 5.000000e-01 : f32
    %108 = vector.broadcast %cst_47 : f32 to vector<8x128xf32>
    %109 = arith.mulf %108, %107 : vector<8x128xf32>
    %cst_48 = arith.constant 5.000000e-01 : f32
    %110 = vector.broadcast %cst_48 : f32 to vector<8x128xf32>
    %111 = arith.addf %109, %110 : vector<8x128xf32>
    %112 = arith.mulf %101, %78 : vector<8x128xf32>
    %113 = arith.mulf %93, %103 : vector<8x128xf32>
    %114 = arith.addf %112, %113 : vector<8x128xf32>
    %115 = math.tanh %114 : vector<8x128xf32>
    %116 = arith.mulf %111, %115 : vector<8x128xf32>
    %117 = arith.truncf %116 : vector<8x128xf32> to vector<8x128xbf16>
    %c0_49 = arith.constant 0 : index
    %c0_50 = arith.constant 0 : index
    %118 = vector.load %arg2[%c0_49, %c0_50] : memref<128x512xbf16, #tpu.memory_space<vmem>>, vector<128x512xbf16>
    %cst_51 = arith.constant dense<0.000000e+00> : vector<8x512xf32>
    %119 = tpu.matmul %117, %118, %cst_51 {dimension_numbers = #tpu.dot_dimension_numbers<[1], [0], [0], [1], [0, 0, 1, 1], [], []>} : vector<8x128xbf16>, vector<128x512xbf16>, vector<8x512xf32> -> vector<8x512xf32>
    %c24 = arith.constant 24 : index
    %c0_52 = arith.constant 0 : index
    %120 = vector.load %arg9[%c24, %c0_52] : memref<64x512xf32, #tpu.memory_space<vmem>>, vector<8x512xf32>
    %121 = arith.addf %120, %119 : vector<8x512xf32>
    %122 = vector.extract_strided_slice %121 {offsets = [0, 0], sizes = [8, 128], strides = [1, 1]} : vector<8x512xf32> to vector<8x128xf32>
    %cst_53 = arith.constant 5.000000e-01 : f32
    %123 = vector.broadcast %cst_53 : f32 to vector<8x128xf32>
    %124 = arith.mulf %123, %122 : vector<8x128xf32>
    %125 = math.tanh %124 : vector<8x128xf32>
    %cst_54 = arith.constant 5.000000e-01 : f32
    %126 = vector.broadcast %cst_54 : f32 to vector<8x128xf32>
    %127 = arith.mulf %126, %125 : vector<8x128xf32>
    %cst_55 = arith.constant 5.000000e-01 : f32
    %128 = vector.broadcast %cst_55 : f32 to vector<8x128xf32>
    %129 = arith.addf %127, %128 : vector<8x128xf32>
    %130 = vector.extract_strided_slice %121 {offsets = [0, 128], sizes = [8, 128], strides = [1, 1]} : vector<8x512xf32> to vector<8x128xf32>
    %cst_56 = arith.constant 5.000000e-01 : f32
    %131 = vector.broadcast %cst_56 : f32 to vector<8x128xf32>
    %132 = arith.mulf %131, %130 : vector<8x128xf32>
    %133 = math.tanh %132 : vector<8x128xf32>
    %cst_57 = arith.constant 5.000000e-01 : f32
    %134 = vector.broadcast %cst_57 : f32 to vector<8x128xf32>
    %135 = arith.mulf %134, %133 : vector<8x128xf32>
    %cst_58 = arith.constant 5.000000e-01 : f32
    %136 = vector.broadcast %cst_58 : f32 to vector<8x128xf32>
    %137 = arith.addf %135, %136 : vector<8x128xf32>
    %138 = vector.extract_strided_slice %121 {offsets = [0, 256], sizes = [8, 128], strides = [1, 1]} : vector<8x512xf32> to vector<8x128xf32>
    %139 = math.tanh %138 : vector<8x128xf32>
    %140 = vector.extract_strided_slice %121 {offsets = [0, 384], sizes = [8, 128], strides = [1, 1]} : vector<8x512xf32> to vector<8x128xf32>
    %cst_59 = arith.constant 5.000000e-01 : f32
    %141 = vector.broadcast %cst_59 : f32 to vector<8x128xf32>
    %142 = arith.mulf %141, %140 : vector<8x128xf32>
    %143 = math.tanh %142 : vector<8x128xf32>
    %cst_60 = arith.constant 5.000000e-01 : f32
    %144 = vector.broadcast %cst_60 : f32 to vector<8x128xf32>
    %145 = arith.mulf %144, %143 : vector<8x128xf32>
    %cst_61 = arith.constant 5.000000e-01 : f32
    %146 = vector.broadcast %cst_61 : f32 to vector<8x128xf32>
    %147 = arith.addf %145, %146 : vector<8x128xf32>
    %148 = arith.mulf %137, %114 : vector<8x128xf32>
    %149 = arith.mulf %129, %139 : vector<8x128xf32>
    %150 = arith.addf %148, %149 : vector<8x128xf32>
    %151 = math.tanh %150 : vector<8x128xf32>
    %152 = arith.mulf %147, %151 : vector<8x128xf32>
    %153 = arith.truncf %152 : vector<8x128xf32> to vector<8x128xbf16>
    %c0_62 = arith.constant 0 : index
    %c0_63 = arith.constant 0 : index
    %154 = vector.load %arg2[%c0_62, %c0_63] : memref<128x512xbf16, #tpu.memory_space<vmem>>, vector<128x512xbf16>
    %cst_64 = arith.constant dense<0.000000e+00> : vector<8x512xf32>
    %155 = tpu.matmul %153, %154, %cst_64 {dimension_numbers = #tpu.dot_dimension_numbers<[1], [0], [0], [1], [0, 0, 1, 1], [], []>} : vector<8x128xbf16>, vector<128x512xbf16>, vector<8x512xf32> -> vector<8x512xf32>
    %c32 = arith.constant 32 : index
    %c0_65 = arith.constant 0 : index
    %156 = vector.load %arg9[%c32, %c0_65] : memref<64x512xf32, #tpu.memory_space<vmem>>, vector<8x512xf32>
    %157 = arith.addf %156, %155 : vector<8x512xf32>
    %158 = vector.extract_strided_slice %157 {offsets = [0, 0], sizes = [8, 128], strides = [1, 1]} : vector<8x512xf32> to vector<8x128xf32>
    %cst_66 = arith.constant 5.000000e-01 : f32
    %159 = vector.broadcast %cst_66 : f32 to vector<8x128xf32>
    %160 = arith.mulf %159, %158 : vector<8x128xf32>
    %161 = math.tanh %160 : vector<8x128xf32>
    %cst_67 = arith.constant 5.000000e-01 : f32
    %162 = vector.broadcast %cst_67 : f32 to vector<8x128xf32>
    %163 = arith.mulf %162, %161 : vector<8x128xf32>
    %cst_68 = arith.constant 5.000000e-01 : f32
    %164 = vector.broadcast %cst_68 : f32 to vector<8x128xf32>
    %165 = arith.addf %163, %164 : vector<8x128xf32>
    %166 = vector.extract_strided_slice %157 {offsets = [0, 128], sizes = [8, 128], strides = [1, 1]} : vector<8x512xf32> to vector<8x128xf32>
    %cst_69 = arith.constant 5.000000e-01 : f32
    %167 = vector.broadcast %cst_69 : f32 to vector<8x128xf32>
    %168 = arith.mulf %167, %166 : vector<8x128xf32>
    %169 = math.tanh %168 : vector<8x128xf32>
    %cst_70 = arith.constant 5.000000e-01 : f32
    %170 = vector.broadcast %cst_70 : f32 to vector<8x128xf32>
    %171 = arith.mulf %170, %169 : vector<8x128xf32>
    %cst_71 = arith.constant 5.000000e-01 : f32
    %172 = vector.broadcast %cst_71 : f32 to vector<8x128xf32>
    %173 = arith.addf %171, %172 : vector<8x128xf32>
    %174 = vector.extract_strided_slice %157 {offsets = [0, 256], sizes = [8, 128], strides = [1, 1]} : vector<8x512xf32> to vector<8x128xf32>
    %175 = math.tanh %174 : vector<8x128xf32>
    %176 = vector.extract_strided_slice %157 {offsets = [0, 384], sizes = [8, 128], strides = [1, 1]} : vector<8x512xf32> to vector<8x128xf32>
    %cst_72 = arith.constant 5.000000e-01 : f32
    %177 = vector.broadcast %cst_72 : f32 to vector<8x128xf32>
    %178 = arith.mulf %177, %176 : vector<8x128xf32>
    %179 = math.tanh %178 : vector<8x128xf32>
    %cst_73 = arith.constant 5.000000e-01 : f32
    %180 = vector.broadcast %cst_73 : f32 to vector<8x128xf32>
    %181 = arith.mulf %180, %179 : vector<8x128xf32>
    %cst_74 = arith.constant 5.000000e-01 : f32
    %182 = vector.broadcast %cst_74 : f32 to vector<8x128xf32>
    %183 = arith.addf %181, %182 : vector<8x128xf32>
    %184 = arith.mulf %173, %150 : vector<8x128xf32>
    %185 = arith.mulf %165, %175 : vector<8x128xf32>
    %186 = arith.addf %184, %185 : vector<8x128xf32>
    %187 = math.tanh %186 : vector<8x128xf32>
    %188 = arith.mulf %183, %187 : vector<8x128xf32>
    %189 = arith.truncf %188 : vector<8x128xf32> to vector<8x128xbf16>
    %c0_75 = arith.constant 0 : index
    %c0_76 = arith.constant 0 : index
    %190 = vector.load %arg2[%c0_75, %c0_76] : memref<128x512xbf16, #tpu.memory_space<vmem>>, vector<128x512xbf16>
    %cst_77 = arith.constant dense<0.000000e+00> : vector<8x512xf32>
    %191 = tpu.matmul %189, %190, %cst_77 {dimension_numbers = #tpu.dot_dimension_numbers<[1], [0], [0], [1], [0, 0, 1, 1], [], []>} : vector<8x128xbf16>, vector<128x512xbf16>, vector<8x512xf32> -> vector<8x512xf32>
    %c40 = arith.constant 40 : index
    %c0_78 = arith.constant 0 : index
    %192 = vector.load %arg9[%c40, %c0_78] : memref<64x512xf32, #tpu.memory_space<vmem>>, vector<8x512xf32>
    %193 = arith.addf %192, %191 : vector<8x512xf32>
    %194 = vector.extract_strided_slice %193 {offsets = [0, 0], sizes = [8, 128], strides = [1, 1]} : vector<8x512xf32> to vector<8x128xf32>
    %cst_79 = arith.constant 5.000000e-01 : f32
    %195 = vector.broadcast %cst_79 : f32 to vector<8x128xf32>
    %196 = arith.mulf %195, %194 : vector<8x128xf32>
    %197 = math.tanh %196 : vector<8x128xf32>
    %cst_80 = arith.constant 5.000000e-01 : f32
    %198 = vector.broadcast %cst_80 : f32 to vector<8x128xf32>
    %199 = arith.mulf %198, %197 : vector<8x128xf32>
    %cst_81 = arith.constant 5.000000e-01 : f32
    %200 = vector.broadcast %cst_81 : f32 to vector<8x128xf32>
    %201 = arith.addf %199, %200 : vector<8x128xf32>
    %202 = vector.extract_strided_slice %193 {offsets = [0, 128], sizes = [8, 128], strides = [1, 1]} : vector<8x512xf32> to vector<8x128xf32>
    %cst_82 = arith.constant 5.000000e-01 : f32
    %203 = vector.broadcast %cst_82 : f32 to vector<8x128xf32>
    %204 = arith.mulf %203, %202 : vector<8x128xf32>
    %205 = math.tanh %204 : vector<8x128xf32>
    %cst_83 = arith.constant 5.000000e-01 : f32
    %206 = vector.broadcast %cst_83 : f32 to vector<8x128xf32>
    %207 = arith.mulf %206, %205 : vector<8x128xf32>
    %cst_84 = arith.constant 5.000000e-01 : f32
    %208 = vector.broadcast %cst_84 : f32 to vector<8x128xf32>
    %209 = arith.addf %207, %208 : vector<8x128xf32>
    %210 = vector.extract_strided_slice %193 {offsets = [0, 256], sizes = [8, 128], strides = [1, 1]} : vector<8x512xf32> to vector<8x128xf32>
    %211 = math.tanh %210 : vector<8x128xf32>
    %212 = vector.extract_strided_slice %193 {offsets = [0, 384], sizes = [8, 128], strides = [1, 1]} : vector<8x512xf32> to vector<8x128xf32>
    %cst_85 = arith.constant 5.000000e-01 : f32
    %213 = vector.broadcast %cst_85 : f32 to vector<8x128xf32>
    %214 = arith.mulf %213, %212 : vector<8x128xf32>
    %215 = math.tanh %214 : vector<8x128xf32>
    %cst_86 = arith.constant 5.000000e-01 : f32
    %216 = vector.broadcast %cst_86 : f32 to vector<8x128xf32>
    %217 = arith.mulf %216, %215 : vector<8x128xf32>
    %cst_87 = arith.constant 5.000000e-01 : f32
    %218 = vector.broadcast %cst_87 : f32 to vector<8x128xf32>
    %219 = arith.addf %217, %218 : vector<8x128xf32>
    %220 = arith.mulf %209, %186 : vector<8x128xf32>
    %221 = arith.mulf %201, %211 : vector<8x128xf32>
    %222 = arith.addf %220, %221 : vector<8x128xf32>
    %223 = math.tanh %222 : vector<8x128xf32>
    %224 = arith.mulf %219, %223 : vector<8x128xf32>
    %225 = arith.truncf %224 : vector<8x128xf32> to vector<8x128xbf16>
    %c0_88 = arith.constant 0 : index
    %c0_89 = arith.constant 0 : index
    %226 = vector.load %arg2[%c0_88, %c0_89] : memref<128x512xbf16, #tpu.memory_space<vmem>>, vector<128x512xbf16>
    %cst_90 = arith.constant dense<0.000000e+00> : vector<8x512xf32>
    %227 = tpu.matmul %225, %226, %cst_90 {dimension_numbers = #tpu.dot_dimension_numbers<[1], [0], [0], [1], [0, 0, 1, 1], [], []>} : vector<8x128xbf16>, vector<128x512xbf16>, vector<8x512xf32> -> vector<8x512xf32>
    %c48 = arith.constant 48 : index
    %c0_91 = arith.constant 0 : index
    %228 = vector.load %arg9[%c48, %c0_91] : memref<64x512xf32, #tpu.memory_space<vmem>>, vector<8x512xf32>
    %229 = arith.addf %228, %227 : vector<8x512xf32>
    %230 = vector.extract_strided_slice %229 {offsets = [0, 0], sizes = [8, 128], strides = [1, 1]} : vector<8x512xf32> to vector<8x128xf32>
    %cst_92 = arith.constant 5.000000e-01 : f32
    %231 = vector.broadcast %cst_92 : f32 to vector<8x128xf32>
    %232 = arith.mulf %231, %230 : vector<8x128xf32>
    %233 = math.tanh %232 : vector<8x128xf32>
    %cst_93 = arith.constant 5.000000e-01 : f32
    %234 = vector.broadcast %cst_93 : f32 to vector<8x128xf32>
    %235 = arith.mulf %234, %233 : vector<8x128xf32>
    %cst_94 = arith.constant 5.000000e-01 : f32
    %236 = vector.broadcast %cst_94 : f32 to vector<8x128xf32>
    %237 = arith.addf %235, %236 : vector<8x128xf32>
    %238 = vector.extract_strided_slice %229 {offsets = [0, 128], sizes = [8, 128], strides = [1, 1]} : vector<8x512xf32> to vector<8x128xf32>
    %cst_95 = arith.constant 5.000000e-01 : f32
    %239 = vector.broadcast %cst_95 : f32 to vector<8x128xf32>
    %240 = arith.mulf %239, %238 : vector<8x128xf32>
    %241 = math.tanh %240 : vector<8x128xf32>
    %cst_96 = arith.constant 5.000000e-01 : f32
    %242 = vector.broadcast %cst_96 : f32 to vector<8x128xf32>
    %243 = arith.mulf %242, %241 : vector<8x128xf32>
    %cst_97 = arith.constant 5.000000e-01 : f32
    %244 = vector.broadcast %cst_97 : f32 to vector<8x128xf32>
    %245 = arith.addf %243, %244 : vector<8x128xf32>
    %246 = vector.extract_strided_slice %229 {offsets = [0, 256], sizes = [8, 128], strides = [1, 1]} : vector<8x512xf32> to vector<8x128xf32>
    %247 = math.tanh %246 : vector<8x128xf32>
    %248 = vector.extract_strided_slice %229 {offsets = [0, 384], sizes = [8, 128], strides = [1, 1]} : vector<8x512xf32> to vector<8x128xf32>
    %cst_98 = arith.constant 5.000000e-01 : f32
    %249 = vector.broadcast %cst_98 : f32 to vector<8x128xf32>
    %250 = arith.mulf %249, %248 : vector<8x128xf32>
    %251 = math.tanh %250 : vector<8x128xf32>
    %cst_99 = arith.constant 5.000000e-01 : f32
    %252 = vector.broadcast %cst_99 : f32 to vector<8x128xf32>
    %253 = arith.mulf %252, %251 : vector<8x128xf32>
    %cst_100 = arith.constant 5.000000e-01 : f32
    %254 = vector.broadcast %cst_100 : f32 to vector<8x128xf32>
    %255 = arith.addf %253, %254 : vector<8x128xf32>
    %256 = arith.mulf %245, %222 : vector<8x128xf32>
    %257 = arith.mulf %237, %247 : vector<8x128xf32>
    %258 = arith.addf %256, %257 : vector<8x128xf32>
    %259 = math.tanh %258 : vector<8x128xf32>
    %260 = arith.mulf %255, %259 : vector<8x128xf32>
    %261 = arith.truncf %260 : vector<8x128xf32> to vector<8x128xbf16>
    %c0_101 = arith.constant 0 : index
    %c0_102 = arith.constant 0 : index
    %262 = vector.load %arg2[%c0_101, %c0_102] : memref<128x512xbf16, #tpu.memory_space<vmem>>, vector<128x512xbf16>
    %cst_103 = arith.constant dense<0.000000e+00> : vector<8x512xf32>
    %263 = tpu.matmul %261, %262, %cst_103 {dimension_numbers = #tpu.dot_dimension_numbers<[1], [0], [0], [1], [0, 0, 1, 1], [], []>} : vector<8x128xbf16>, vector<128x512xbf16>, vector<8x512xf32> -> vector<8x512xf32>
    %c56 = arith.constant 56 : index
    %c0_104 = arith.constant 0 : index
    %264 = vector.load %arg9[%c56, %c0_104] : memref<64x512xf32, #tpu.memory_space<vmem>>, vector<8x512xf32>
    %265 = arith.addf %264, %263 : vector<8x512xf32>
    %266 = vector.extract_strided_slice %265 {offsets = [0, 0], sizes = [8, 128], strides = [1, 1]} : vector<8x512xf32> to vector<8x128xf32>
    %cst_105 = arith.constant 5.000000e-01 : f32
    %267 = vector.broadcast %cst_105 : f32 to vector<8x128xf32>
    %268 = arith.mulf %267, %266 : vector<8x128xf32>
    %269 = math.tanh %268 : vector<8x128xf32>
    %cst_106 = arith.constant 5.000000e-01 : f32
    %270 = vector.broadcast %cst_106 : f32 to vector<8x128xf32>
    %271 = arith.mulf %270, %269 : vector<8x128xf32>
    %cst_107 = arith.constant 5.000000e-01 : f32
    %272 = vector.broadcast %cst_107 : f32 to vector<8x128xf32>
    %273 = arith.addf %271, %272 : vector<8x128xf32>
    %274 = vector.extract_strided_slice %265 {offsets = [0, 128], sizes = [8, 128], strides = [1, 1]} : vector<8x512xf32> to vector<8x128xf32>
    %cst_108 = arith.constant 5.000000e-01 : f32
    %275 = vector.broadcast %cst_108 : f32 to vector<8x128xf32>
    %276 = arith.mulf %275, %274 : vector<8x128xf32>
    %277 = math.tanh %276 : vector<8x128xf32>
    %cst_109 = arith.constant 5.000000e-01 : f32
    %278 = vector.broadcast %cst_109 : f32 to vector<8x128xf32>
    %279 = arith.mulf %278, %277 : vector<8x128xf32>
    %cst_110 = arith.constant 5.000000e-01 : f32
    %280 = vector.broadcast %cst_110 : f32 to vector<8x128xf32>
    %281 = arith.addf %279, %280 : vector<8x128xf32>
    %282 = vector.extract_strided_slice %265 {offsets = [0, 256], sizes = [8, 128], strides = [1, 1]} : vector<8x512xf32> to vector<8x128xf32>
    %283 = math.tanh %282 : vector<8x128xf32>
    %284 = vector.extract_strided_slice %265 {offsets = [0, 384], sizes = [8, 128], strides = [1, 1]} : vector<8x512xf32> to vector<8x128xf32>
    %cst_111 = arith.constant 5.000000e-01 : f32
    %285 = vector.broadcast %cst_111 : f32 to vector<8x128xf32>
    %286 = arith.mulf %285, %284 : vector<8x128xf32>
    %287 = math.tanh %286 : vector<8x128xf32>
    %cst_112 = arith.constant 5.000000e-01 : f32
    %288 = vector.broadcast %cst_112 : f32 to vector<8x128xf32>
    %289 = arith.mulf %288, %287 : vector<8x128xf32>
    %cst_113 = arith.constant 5.000000e-01 : f32
    %290 = vector.broadcast %cst_113 : f32 to vector<8x128xf32>
    %291 = arith.addf %289, %290 : vector<8x128xf32>
    %292 = arith.mulf %281, %258 : vector<8x128xf32>
    %293 = arith.mulf %273, %283 : vector<8x128xf32>
    %294 = arith.addf %292, %293 : vector<8x128xf32>
    %295 = math.tanh %294 : vector<8x128xf32>
    %296 = arith.mulf %291, %295 : vector<8x128xf32>
    %c0_114 = arith.constant 0 : index
    %c0_115 = arith.constant 0 : index
    %297 = vector.load %arg4[%c0_114, %c0_115] : memref<128x128xf32, #tpu.memory_space<vmem>>, vector<128x128xf32>
    %cst_116 = arith.constant dense<0.000000e+00> : vector<8x128xf32>
    %298 = tpu.matmul %296, %297, %cst_116 {dimension_numbers = #tpu.dot_dimension_numbers<[1], [0], [0], [1], [0, 0, 1, 1], [], []>} : vector<8x128xf32>, vector<128x128xf32>, vector<8x128xf32> -> vector<8x128xf32>
    %c0_117 = arith.constant 0 : index
    %c0_118 = arith.constant 0 : index
    %299 = vector.load %arg5[%c0_117, %c0_118] : memref<1x128xf32, #tpu.memory_space<vmem>>, vector<1x128xf32>
    %300 = vector.broadcast %299 : vector<1x128xf32> to vector<8x128xf32>
    %301 = arith.addf %298, %300 : vector<8x128xf32>
    %cst_119 = arith.constant 0.000000e+00 : f32
    %302 = vector.broadcast %cst_119 : f32 to vector<8x128xf32>
    %303 = arith.maximumf %301, %302 : vector<8x128xf32>
    %c0_120 = arith.constant 0 : index
    %c0_121 = arith.constant 0 : index
    %304 = vector.load %arg6[%c0_120, %c0_121] : memref<128x128xf32, #tpu.memory_space<vmem>>, vector<128x128xf32>
    %cst_122 = arith.constant dense<0.000000e+00> : vector<8x128xf32>
    %305 = tpu.matmul %303, %304, %cst_122 {dimension_numbers = #tpu.dot_dimension_numbers<[1], [0], [0], [1], [0, 0, 1, 1], [], []>} : vector<8x128xf32>, vector<128x128xf32>, vector<8x128xf32> -> vector<8x128xf32>
    %c0_123 = arith.constant 0 : index
    %c0_124 = arith.constant 0 : index
    %306 = vector.load %arg7[%c0_123, %c0_124] : memref<1x128xf32, #tpu.memory_space<vmem>>, vector<1x128xf32>
    %307 = vector.broadcast %306 : vector<1x128xf32> to vector<8x128xf32>
    %308 = arith.addf %305, %307 : vector<8x128xf32>
    %c0_125 = arith.constant 0 : index
    %c0_126 = arith.constant 0 : index
    %309 = vector.load %arg8[%c0_125, %c0_126] : memref<8x128xf32, #tpu.memory_space<vmem>>, vector<8x128xf32>
    tpu.vector_store %arg8[%c0_125, %c0_126], %308 {strides = array<i32>} : memref<8x128xf32, #tpu.memory_space<vmem>>, vector<8x128xf32>,
    return
  }
}

</mosaic_0001>

<llo_original>
// kernel: lstm_forward.1
$region0: #{lstm_forward.1}
  #allocation0 [shape = 'u32[]', space=smem, size = 0x4, offset = 0x4, fixed_abs, tag = 'smem constant byte address 0x4 - core index']
  #allocation1 [shape = 'u32[144,128]{1,0:T(1,128)}', space=vmem, size = 0x12000, scoped, tag = 'internal scratch']
  #allocation2 [shape = 'f32[64,512]{1,0:T(8,128)}', space=vmem, size = 0x20000, scoped, tag = 'scratch operand']
  %s0 = inlined_call_operand.vmem [shape: f32[64,56], index: 0, kind: input, shape index: {}]
  %s1 = inlined_call_operand.vmem [shape: f32[56,512], index: 1, kind: input, shape index: {}]
  %s2 = inlined_call_operand.vmem [shape: bf16[128,512], index: 2, kind: input, shape index: {}]
  %s3 = inlined_call_operand.vmem [shape: f32[1,512], index: 3, kind: input, shape index: {}]
  %s4 = inlined_call_operand.vmem [shape: f32[128,128], index: 4, kind: input, shape index: {}]
  %s5 = inlined_call_operand.vmem [shape: f32[1,128], index: 5, kind: input, shape index: {}]
  %s6 = inlined_call_operand.vmem [shape: f32[128,128], index: 6, kind: input, shape index: {}]
  %s7 = inlined_call_operand.vmem [shape: f32[1,128], index: 7, kind: input, shape index: {}]
  %s8 = inlined_call_operand.vmem [shape: f32[8,128], index: 8, kind: output, shape index: {}]
  %s9 = sld [smem:[#allocation0]]
  $region42: #{lstm_forward.1} parent=0
    _
  %s11 = ssub.s32 1, %s9
  %s12 = scalar_select 0, %s11, %s9
  // Predicated region
  $region2: #{lstm_forward.1} parent=0 // pred_check
    _
  $region3: #{lstm_forward.1} parent=0 // pred_check_branch
    %14 = sbr.rel (0) target = $region5
  $region4: #{lstm_forward.1} parent=0 // pred_region
    _
  $region5: #{lstm_forward.1} parent=0 // pred_fallthru
    _
  // Predicated region
  $region6: #{lstm_forward.1} parent=0 // pred_check
    _
  $region7: #{lstm_forward.1} parent=0 // pred_check_branch
    %16 = sbr.rel (0) target = $region9
  $region8: #{lstm_forward.1} parent=0 // pred_region
    _
  $region9: #{lstm_forward.1} parent=0 // pred_fallthru
    _
  // Predicated region
  $region10: #{lstm_forward.1} parent=0 // pred_check
    _
  $region11: #{lstm_forward.1} parent=0 // pred_check_branch
    %18 = sbr.rel (0) target = $region13
  $region12: #{lstm_forward.1} parent=0 // pred_region
    _
  $region13: #{lstm_forward.1} parent=0 // pred_fallthru
    _
  // Predicated region
  $region14: #{lstm_forward.1} parent=0 // pred_check
    _
  $region15: #{lstm_forward.1} parent=0 // pred_check_branch
    %20 = sbr.rel (0) target = $region17
  $region16: #{lstm_forward.1} parent=0 // pred_region
    _
  $region17: #{lstm_forward.1} parent=0 // pred_fallthru
    _
  // Predicated region
  $region18: #{lstm_forward.1} parent=0 // pred_check
    _
  $region19: #{lstm_forward.1} parent=0 // pred_check_branch
    %22 = sbr.rel (0) target = $region21
  $region20: #{lstm_forward.1} parent=0 // pred_region
    _
  $region21: #{lstm_forward.1} parent=0 // pred_fallthru
    _
  // Predicated region
  $region22: #{lstm_forward.1} parent=0 // pred_check
    _
  $region23: #{lstm_forward.1} parent=0 // pred_check_branch
    %24 = sbr.rel (0) target = $region25
  $region24: #{lstm_forward.1} parent=0 // pred_region
    _
  $region25: #{lstm_forward.1} parent=0 // pred_fallthru
    _
  // Predicated region
  $region26: #{lstm_forward.1} parent=0 // pred_check
    _
  $region27: #{lstm_forward.1} parent=0 // pred_check_branch
    %26 = sbr.rel (0) target = $region29
  $region28: #{lstm_forward.1} parent=0 // pred_region
    _
  $region29: #{lstm_forward.1} parent=0 // pred_fallthru
    _
  // Predicated region
  $region30: #{lstm_forward.1} parent=0 // pred_check
    _
  $region31: #{lstm_forward.1} parent=0 // pred_check_branch
    %28 = sbr.rel (0) target = $region33
  $region32: #{lstm_forward.1} parent=0 // pred_region
    _
  $region33: #{lstm_forward.1} parent=0 // pred_fallthru
    _
  %v30 = vld [vmem:[%s0] sm:$0xff]
  %v31 = vld [vmem:[%s0 + $0x8] sm:$0xff]
  %v32 = vld [vmem:[%s0 + $0x10] sm:$0xff]
  %v33 = vld [vmem:[%s0 + $0x18] sm:$0xff]
  %v34 = vld [vmem:[%s0 + $0x20] sm:$0xff]
  %v35 = vld [vmem:[%s0 + $0x28] sm:$0xff]
  %v36 = vld [vmem:[%s0 + $0x30] sm:$0xff]
  %v37 = vld [vmem:[%s0 + $0x38] sm:$0xff]
  %v38 = vld [vmem:[%s1] sm:$0xff]
  %v39 = vld [vmem:[%s1 + $0x8] sm:$0xff]
  %v40 = vld [vmem:[%s1 + $0x10] sm:$0xff]
  %v41 = vld [vmem:[%s1 + $0x18] sm:$0xff]
  %v42 = vld [vmem:[%s1 + $0x20] sm:$0xff]
  %v43 = vld [vmem:[%s1 + $0x28] sm:$0xff]
  %v44 = vld [vmem:[%s1 + $0x30] sm:$0xff]
  %v45 = vld [vmem:[%s1 + $0x38] sm:$0xff]
  %v46 = vld [vmem:[%s1 + $0x40] sm:$0xff]
  %v47 = vld [vmem:[%s1 + $0x48] sm:$0xff]
  %v48 = vld [vmem:[%s1 + $0x50] sm:$0xff]
  %v49 = vld [vmem:[%s1 + $0x58] sm:$0xff]
  %v50 = vld [vmem:[%s1 + $0x60] sm:$0xff]
  %v51 = vld [vmem:[%s1 + $0x68] sm:$0xff]
  %v52 = vld [vmem:[%s1 + $0x70] sm:$0xff]
  %v53 = vld [vmem:[%s1 + $0x78] sm:$0xff]
  %v54 = vld [vmem:[%s1 + $0x80] sm:$0xff]
  %v55 = vld [vmem:[%s1 + $0x88] sm:$0xff]
  %v56 = vld [vmem:[%s1 + $0x90] sm:$0xff]
  %v57 = vld [vmem:[%s1 + $0x98] sm:$0xff]
  %v58 = vld [vmem:[%s1 + $0xa0] sm:$0xff]
  %v59 = vld [vmem:[%s1 + $0xa8] sm:$0xff]
  %v60 = vld [vmem:[%s1 + $0xb0] sm:$0xff]
  %v61 = vld [vmem:[%s1 + $0xb8] sm:$0xff]
  %v62 = vld [vmem:[%s1 + $0xc0] sm:$0xff]
  %v63 = vld [vmem:[%s1 + $0xc8] sm:$0xff]
  %v64 = vld [vmem:[%s1 + $0xd0] sm:$0xff]
  %v65 = vld [vmem:[%s1 + $0xd8] sm:$0xff]
  %v66 = vld [vmem:[%s3] sm:$0xf]
  %v68 = vlaneseq
  %v69 = vshrl.u32 %v68, 7
  %v70 = vsub.s32 0, %v69
  %v71 = vrot.slane %v66, %v70
  %v72 = vlaneseq
  %v73 = vshrl.u32 %v72, 7
  %v74 = vsub.s32 1, %v73
  %v75 = vrot.slane %v66, %v74
  %v76 = vlaneseq
  %v77 = vshrl.u32 %v76, 7
  %v78 = vsub.s32 2, %v77
  %v79 = vrot.slane %v66, %v78
  %v80 = vlaneseq
  %v81 = vshrl.u32 %v80, 7
  %v82 = vsub.s32 3, %v81
  %v83 = vrot.slane %v66, %v82
  %vm88 = vcmask 457728
  %v90 = vsel %vm88, %v30, 0
  %v93 = vsel %vm88, %v31, 0
  %v96 = vsel %vm88, %v32, 0
  %v99 = vsel %vm88, %v33, 0
  %v102 = vsel %vm88, %v34, 0
  %v105 = vsel %vm88, %v35, 0
  %v108 = vsel %vm88, %v36, 0
  %v111 = vsel %vm88, %v37, 0
  %113 = vmatprep.subr.mxu0 0.0
  %114 = vmatpush1.msra.mxu0 0.0
  %115 = vmatprep.subr.mxu0 0.0
  %116 = vmatpush1.msra.mxu0 0.0
  %117 = vmatprep.subr.mxu0 0.0
  %118 = vmatpush1.msra.mxu0 0.0
  %119 = vmatprep.subr.mxu0 0.0
  %120 = vmatpush1.msra.mxu0 0.0
  %121 = vmatprep.subr.mxu0 0.0
  %122 = vmatpush1.msra.mxu0 0.0
  %123 = vmatprep.subr.mxu0 0.0
  %124 = vmatpush1.msra.mxu0 0.0
  %125 = vmatprep.subr.mxu0 0.0
  %126 = vmatpush1.msra.mxu0 0.0
  %127 = vmatprep.subr.mxu0 0.0
  %128 = vmatpush1.msra.mxu0 0.0
  %129 = vmatprep.subr.mxu0 0.0
  %130 = vmatpush1.msra.mxu0 0.0
  %131 = vmatprep.subr.mxu0 %v63
  %132 = vmatpush1.msra.mxu0 %v62
  %133 = vmatprep.subr.mxu0 %v59
  %134 = vmatpush1.msra.mxu0 %v58
  %135 = vmatprep.subr.mxu0 %v55
  %136 = vmatpush1.msra.mxu0 %v54
  %137 = vmatprep.subr.mxu0 %v51
  %138 = vmatpush1.msra.mxu0 %v50
  %139 = vmatprep.subr.mxu0 %v47
  %140 = vmatpush1.msra.mxu0 %v46
  %141 = vmatprep.subr.mxu0 %v43
  %142 = vmatpush1.msra.mxu0 %v42
  %143 = vmatprep.subr.mxu0 %v39
  %144 = vmatpush1.msra.mxu0 %v38
  %145 = vmatprep.subr.mxu0 0.0
  %146 = vmatpush2.msra.mxu0 0.0
  %147 = vmatprep.subr.mxu0 0.0
  %148 = vmatpush2.msra.mxu0 0.0
  %149 = vmatprep.subr.mxu0 0.0
  %150 = vmatpush2.msra.mxu0 0.0
  %151 = vmatprep.subr.mxu0 0.0
  %152 = vmatpush2.msra.mxu0 0.0
  %153 = vmatprep.subr.mxu0 0.0
  %154 = vmatpush2.msra.mxu0 0.0
  %155 = vmatprep.subr.mxu0 0.0
  %156 = vmatpush2.msra.mxu0 0.0
  %157 = vmatprep.subr.mxu0 0.0
  %158 = vmatpush2.msra.mxu0 0.0
  %159 = vmatprep.subr.mxu0 0.0
  %160 = vmatpush2.msra.mxu0 0.0
  %161 = vmatprep.subr.mxu0 0.0
  %162 = vmatpush2.msra.mxu0 0.0
  %163 = vmatprep.subr.mxu0 0.0
  %164 = vmatpush2.msra.mxu0 0.0
  %165 = vmatprep.subr.mxu0 0.0
  %166 = vmatpush2.msra.mxu0 0.0
  %167 = vmatprep.subr.mxu0 0.0
  %168 = vmatpush2.msra.mxu0 0.0
  %169 = vmatprep.subr.mxu0 0.0
  %170 = vmatpush2.msra.mxu0 0.0
  %171 = vmatprep.subr.mxu0 0.0
  %172 = vmatpush2.msra.mxu0 0.0
  %173 = vmatprep.subr.mxu0 0.0
  %174 = vmatpush2.msra.mxu0 0.0
  %175 = vmatprep.subr.mxu0 0.0
  %176 = vmatpush2.msra.mxu0 0.0
  %177 = vmatprep.mubr.f32.mxu0 0.0
  %178 = vmatmul.mubr.f32.gmra.mxu0 %v90
  %v179 = vpop.f32.mrf.mxu0
  %v180 = vadd.f32 %v71, %v179
  %v181 = vpop.f32.mrf.mxu0
  %v182 = vadd.f32 %v75, %v181
  %183 = vmatprep.mubr.f32.mxu0 0.0
  %184 = vmatmul.mubr.f32.gmra.mxu0 %v93
  %v185 = vpop.f32.mrf.mxu0
  %v186 = vadd.f32 %v71, %v185
  %v187 = vpop.f32.mrf.mxu0
  %v188 = vadd.f32 %v75, %v187
  %189 = vmatprep.mubr.f32.mxu0 0.0
  %190 = vmatmul.mubr.f32.gmra.mxu0 %v96
  %v191 = vpop.f32.mrf.mxu0
  %v192 = vadd.f32 %v71, %v191
  %v193 = vpop.f32.mrf.mxu0
  %v194 = vadd.f32 %v75, %v193
  %195 = vmatprep.mubr.f32.mxu0 0.0
  %196 = vmatmul.mubr.f32.gmra.mxu0 %v99
  %v197 = vpop.f32.mrf.mxu0
  %v198 = vadd.f32 %v71, %v197
  %v199 = vpop.f32.mrf.mxu0
  %v200 = vadd.f32 %v75, %v199
  %201 = vmatprep.mubr.f32.mxu0 0.0
  %202 = vmatmul.mubr.f32.gmra.mxu0 %v102
  %v203 = vpop.f32.mrf.mxu0
  %v204 = vadd.f32 %v71, %v203
  %v205 = vpop.f32.mrf.mxu0
  %v206 = vadd.f32 %v75, %v205
  %207 = vmatprep.mubr.f32.mxu0 0.0
  %208 = vmatmul.mubr.f32.gmra.mxu0 %v105
  %v209 = vpop.f32.mrf.mxu0
  %v210 = vadd.f32 %v71, %v209
  %v211 = vpop.f32.mrf.mxu0
  %v212 = vadd.f32 %v75, %v211
  %213 = vmatprep.mubr.f32.mxu0 0.0
  %214 = vmatmul.mubr.f32.gmra.mxu0 %v108
  %v215 = vpop.f32.mrf.mxu0
  %v216 = vadd.f32 %v71, %v215
  %v217 = vpop.f32.mrf.mxu0
  %v218 = vadd.f32 %v75, %v217
  %219 = vmatprep.mubr.f32.mxu0 0.0
  %220 = vmatmul.mubr.f32.gmra.mxu0 %v111
  %v221 = vpop.f32.mrf.mxu0
  %v222 = vadd.f32 %v71, %v221
  %v223 = vpop.f32.mrf.mxu0
  %v224 = vadd.f32 %v75, %v223
  %225 = vdwg.mxu0
  %226 = vmatprep.subr.mxu0 0.0
  %227 = vmatpush1.msra.mxu0 0.0
  %228 = vmatprep.subr.mxu0 0.0
  %229 = vmatpush1.msra.mxu0 0.0
  %230 = vmatprep.subr.mxu0 0.0
  %231 = vmatpush1.msra.mxu0 0.0
  %232 = vmatprep.subr.mxu0 0.0
  %233 = vmatpush1.msra.mxu0 0.0
  %234 = vmatprep.subr.mxu0 0.0
  %235 = vmatpush1.msra.mxu0 0.0
  %236 = vmatprep.subr.mxu0 0.0
  %237 = vmatpush1.msra.mxu0 0.0
  %238 = vmatprep.subr.mxu0 0.0
  %239 = vmatpush1.msra.mxu0 0.0
  %240 = vmatprep.subr.mxu0 0.0
  %241 = vmatpush1.msra.mxu0 0.0
  %242 = vmatprep.subr.mxu0 0.0
  %243 = vmatpush1.msra.mxu0 0.0
  %244 = vmatprep.subr.mxu0 %v65
  %245 = vmatpush1.msra.mxu0 %v64
  %246 = vmatprep.subr.mxu0 %v61
  %247 = vmatpush1.msra.mxu0 %v60
  %248 = vmatprep.subr.mxu0 %v57
  %249 = vmatpush1.msra.mxu0 %v56
  %250 = vmatprep.subr.mxu0 %v53
  %251 = vmatpush1.msra.mxu0 %v52
  %252 = vmatprep.subr.mxu0 %v49
  %253 = vmatpush1.msra.mxu0 %v48
  %254 = vmatprep.subr.mxu0 %v45
  %255 = vmatpush1.msra.mxu0 %v44
  %256 = vmatprep.subr.mxu0 %v41
  %257 = vmatpush1.msra.mxu0 %v40
  %258 = vmatprep.subr.mxu0 0.0
  %259 = vmatpush2.msra.mxu0 0.0
  %260 = vmatprep.subr.mxu0 0.0
  %261 = vmatpush2.msra.mxu0 0.0
  %262 = vmatprep.subr.mxu0 0.0
  %263 = vmatpush2.msra.mxu0 0.0
  %264 = vmatprep.subr.mxu0 0.0
  %265 = vmatpush2.msra.mxu0 0.0
  %266 = vmatprep.subr.mxu0 0.0
  %267 = vmatpush2.msra.mxu0 0.0
  %268 = vmatprep.subr.mxu0 0.0
  %269 = vmatpush2.msra.mxu0 0.0
  %270 = vmatprep.subr.mxu0 0.0
  %271 = vmatpush2.msra.mxu0 0.0
  %272 = vmatprep.subr.mxu0 0.0
  %273 = vmatpush2.msra.mxu0 0.0
  %274 = vmatprep.subr.mxu0 0.0
  %275 = vmatpush2.msra.mxu0 0.0
  %276 = vmatprep.subr.mxu0 0.0
  %277 = vmatpush2.msra.mxu0 0.0
  %278 = vmatprep.subr.mxu0 0.0
  %279 = vmatpush2.msra.mxu0 0.0
  %280 = vmatprep.subr.mxu0 0.0
  %281 = vmatpush2.msra.mxu0 0.0
  %282 = vmatprep.subr.mxu0 0.0
  %283 = vmatpush2.msra.mxu0 0.0
  %284 = vmatprep.subr.mxu0 0.0
  %285 = vmatpush2.msra.mxu0 0.0
  %286 = vmatprep.subr.mxu0 0.0
  %287 = vmatpush2.msra.mxu0 0.0
  %288 = vmatprep.subr.mxu0 0.0
  %289 = vmatpush2.msra.mxu0 0.0
  %290 = vmatprep.mubr.f32.mxu0 0.0
  %291 = vmatmul.mubr.f32.gmra.mxu0 %v90
  %v292 = vpop.f32.mrf.mxu0
  %v293 = vadd.f32 %v79, %v292
  %v294 = vpop.f32.mrf.mxu0
  %v295 = vadd.f32 %v83, %v294
  %296 = vmatprep.mubr.f32.mxu0 0.0
  %297 = vmatmul.mubr.f32.gmra.mxu0 %v93
  %v298 = vpop.f32.mrf.mxu0
  %v299 = vadd.f32 %v79, %v298
  %v300 = vpop.f32.mrf.mxu0
  %v301 = vadd.f32 %v83, %v300
  %302 = vmatprep.mubr.f32.mxu0 0.0
  %303 = vmatmul.mubr.f32.gmra.mxu0 %v96
  %v304 = vpop.f32.mrf.mxu0
  %v305 = vadd.f32 %v79, %v304
  %v306 = vpop.f32.mrf.mxu0
  %v307 = vadd.f32 %v83, %v306
  %308 = vmatprep.mubr.f32.mxu0 0.0
  %309 = vmatmul.mubr.f32.gmra.mxu0 %v99
  %v310 = vpop.f32.mrf.mxu0
  %v311 = vadd.f32 %v79, %v310
  %v312 = vpop.f32.mrf.mxu0
  %v313 = vadd.f32 %v83, %v312
  %314 = vmatprep.mubr.f32.mxu0 0.0
  %315 = vmatmul.mubr.f32.gmra.mxu0 %v102
  %v316 = vpop.f32.mrf.mxu0
  %v317 = vadd.f32 %v79, %v316
  %v318 = vpop.f32.mrf.mxu0
  %v319 = vadd.f32 %v83, %v318
  %320 = vmatprep.mubr.f32.mxu0 0.0
  %321 = vmatmul.mubr.f32.gmra.mxu0 %v105
  %v322 = vpop.f32.mrf.mxu0
  %v323 = vadd.f32 %v79, %v322
  %v324 = vpop.f32.mrf.mxu0
  %v325 = vadd.f32 %v83, %v324
  %326 = vmatprep.mubr.f32.mxu0 0.0
  %327 = vmatmul.mubr.f32.gmra.mxu0 %v108
  %v328 = vpop.f32.mrf.mxu0
  %v329 = vadd.f32 %v79, %v328
  %v330 = vpop.f32.mrf.mxu0
  %v331 = vadd.f32 %v83, %v330
  %332 = vmatprep.mubr.f32.mxu0 0.0
  %333 = vmatmul.mubr.f32.gmra.mxu0 %v111
  %v334 = vpop.f32.mrf.mxu0
  %v335 = vadd.f32 %v79, %v334
  %v336 = vpop.f32.mrf.mxu0
  %v337 = vadd.f32 %v83, %v336
  %338 = vdwg.mxu0
  %339 = vst [vmem:[#allocation2] sm:$0xff] %v180
  %340 = vst [vmem:[#allocation2 + $0x8] sm:$0xff] %v182
  %341 = vst [vmem:[#allocation2 + $0x10] sm:$0xff] %v293
  %342 = vst [vmem:[#allocation2 + $0x18] sm:$0xff] %v295
  %343 = vst [vmem:[#allocation2 + $0x20] sm:$0xff] %v186
  %344 = vst [vmem:[#allocation2 + $0x28] sm:$0xff] %v188
  %345 = vst [vmem:[#allocation2 + $0x30] sm:$0xff] %v299
  %346 = vst [vmem:[#allocation2 + $0x38] sm:$0xff] %v301
  %347 = vst [vmem:[#allocation2 + $0x40] sm:$0xff] %v192
  %348 = vst [vmem:[#allocation2 + $0x48] sm:$0xff] %v194
  %349 = vst [vmem:[#allocation2 + $0x50] sm:$0xff] %v305
  %350 = vst [vmem:[#allocation2 + $0x58] sm:$0xff] %v307
  %351 = vst [vmem:[#allocation2 + $0x60] sm:$0xff] %v198
  %352 = vst [vmem:[#allocation2 + $0x68] sm:$0xff] %v200
  %353 = vst [vmem:[#allocation2 + $0x70] sm:$0xff] %v311
  %354 = vst [vmem:[#allocation2 + $0x78] sm:$0xff] %v313
  %355 = vst [vmem:[#allocation2 + $0x80] sm:$0xff] %v204
  %356 = vst [vmem:[#allocation2 + $0x88] sm:$0xff] %v206
  %357 = vst [vmem:[#allocation2 + $0x90] sm:$0xff] %v317
  %358 = vst [vmem:[#allocation2 + $0x98] sm:$0xff] %v319
  %359 = vst [vmem:[#allocation2 + $0xa0] sm:$0xff] %v210
  %360 = vst [vmem:[#allocation2 + $0xa8] sm:$0xff] %v212
  %361 = vst [vmem:[#allocation2 + $0xb0] sm:$0xff] %v323
  %362 = vst [vmem:[#allocation2 + $0xb8] sm:$0xff] %v325
  %363 = vst [vmem:[#allocation2 + $0xc0] sm:$0xff] %v216
  %364 = vst [vmem:[#allocation2 + $0xc8] sm:$0xff] %v218
  %365 = vst [vmem:[#allocation2 + $0xd0] sm:$0xff] %v329
  %366 = vst [vmem:[#allocation2 + $0xd8] sm:$0xff] %v331
  %367 = vst [vmem:[#allocation2 + $0xe0] sm:$0xff] %v222
  %368 = vst [vmem:[#allocation2 + $0xe8] sm:$0xff] %v224
  %369 = vst [vmem:[#allocation2 + $0xf0] sm:$0xff] %v335
  %370 = vst [vmem:[#allocation2 + $0xf8] sm:$0xff] %v337
  %v371 = vld [vmem:[%s2] sm:$0xff]
  %v372 = vld [vmem:[%s2 + $0x8] sm:$0xff]
  %v373 = vld [vmem:[%s2 + $0x10] sm:$0xff]
  %v374 = vld [vmem:[%s2 + $0x18] sm:$0xff]
  %v375 = vld [vmem:[%s2 + $0x20] sm:$0xff]
  %v376 = vld [vmem:[%s2 + $0x28] sm:$0xff]
  %v377 = vld [vmem:[%s2 + $0x30] sm:$0xff]
  %v378 = vld [vmem:[%s2 + $0x38] sm:$0xff]
  %v379 = vld [vmem:[%s2 + $0x40] sm:$0xff]
  %v380 = vld [vmem:[%s2 + $0x48] sm:$0xff]
  %v381 = vld [vmem:[%s2 + $0x50] sm:$0xff]
  %v382 = vld [vmem:[%s2 + $0x58] sm:$0xff]
  %v383 = vld [vmem:[%s2 + $0x60] sm:$0xff]
  %v384 = vld [vmem:[%s2 + $0x68] sm:$0xff]
  %v385 = vld [vmem:[%s2 + $0x70] sm:$0xff]
  %v386 = vld [vmem:[%s2 + $0x78] sm:$0xff]
  %v387 = vld [vmem:[%s2 + $0x80] sm:$0xff]
  %v388 = vld [vmem:[%s2 + $0x88] sm:$0xff]
  %v389 = vld [vmem:[%s2 + $0x90] sm:$0xff]
  %v390 = vld [vmem:[%s2 + $0x98] sm:$0xff]
  %v391 = vld [vmem:[%s2 + $0xa0] sm:$0xff]
  %v392 = vld [vmem:[%s2 + $0xa8] sm:$0xff]
  %v393 = vld [vmem:[%s2 + $0xb0] sm:$0xff]
  %v394 = vld [vmem:[%s2 + $0xb8] sm:$0xff]
  %v395 = vld [vmem:[%s2 + $0xc0] sm:$0xff]
  %v396 = vld [vmem:[%s2 + $0xc8] sm:$0xff]
  %v397 = vld [vmem:[%s2 + $0xd0] sm:$0xff]
  %v398 = vld [vmem:[%s2 + $0xd8] sm:$0xff]
  %v399 = vld [vmem:[%s2 + $0xe0] sm:$0xff]
  %v400 = vld [vmem:[%s2 + $0xe8] sm:$0xff]
  %v401 = vld [vmem:[%s2 + $0xf0] sm:$0xff]
  %v402 = vld [vmem:[%s2 + $0xf8] sm:$0xff]
  %v435 = vunpack.c.l.b16 %v371
  %v436 = vunpack.c.h.b16 %v371
  %v437 = vunpack.c.l.b16 %v372
  %v438 = vunpack.c.h.b16 %v372
  %v439 = vunpack.c.l.b16 %v373
  %v440 = vunpack.c.h.b16 %v373
  %v441 = vunpack.c.l.b16 %v374
  %v442 = vunpack.c.h.b16 %v374
  %v443 = vunpack.c.l.b16 %v375
  %v444 = vunpack.c.h.b16 %v375
  %v445 = vunpack.c.l.b16 %v376
  %v446 = vunpack.c.h.b16 %v376
  %v447 = vunpack.c.l.b16 %v377
  %v448 = vunpack.c.h.b16 %v377
  %v449 = vunpack.c.l.b16 %v378
  %v450 = vunpack.c.h.b16 %v378
  %v451 = vunpack.c.l.b16 %v379
  %v452 = vunpack.c.h.b16 %v379
  %v453 = vunpack.c.l.b16 %v380
  %v454 = vunpack.c.h.b16 %v380
  %v455 = vunpack.c.l.b16 %v381
  %v456 = vunpack.c.h.b16 %v381
  %v457 = vunpack.c.l.b16 %v382
  %v458 = vunpack.c.h.b16 %v382
  %v459 = vunpack.c.l.b16 %v383
  %v460 = vunpack.c.h.b16 %v383
  %v461 = vunpack.c.l.b16 %v384
  %v462 = vunpack.c.h.b16 %v384
  %v463 = vunpack.c.l.b16 %v385
  %v464 = vunpack.c.h.b16 %v385
  %v465 = vunpack.c.l.b16 %v386
  %v466 = vunpack.c.h.b16 %v386
  %v467 = vunpack.c.l.b16 %v387
  %v468 = vunpack.c.h.b16 %v387
  %v469 = vunpack.c.l.b16 %v388
  %v470 = vunpack.c.h.b16 %v388
  %v471 = vunpack.c.l.b16 %v389
  %v472 = vunpack.c.h.b16 %v389
  %v473 = vunpack.c.l.b16 %v390
  %v474 = vunpack.c.h.b16 %v390
  %v475 = vunpack.c.l.b16 %v391
  %v476 = vunpack.c.h.b16 %v391
  %v477 = vunpack.c.l.b16 %v392
  %v478 = vunpack.c.h.b16 %v392
  %v479 = vunpack.c.l.b16 %v393
  %v480 = vunpack.c.h.b16 %v393
  %v481 = vunpack.c.l.b16 %v394
  %v482 = vunpack.c.h.b16 %v394
  %v483 = vunpack.c.l.b16 %v395
  %v484 = vunpack.c.h.b16 %v395
  %v485 = vunpack.c.l.b16 %v396
  %v486 = vunpack.c.h.b16 %v396
  %v487 = vunpack.c.l.b16 %v397
  %v488 = vunpack.c.h.b16 %v397
  %v489 = vunpack.c.l.b16 %v398
  %v490 = vunpack.c.h.b16 %v398
  %v491 = vunpack.c.l.b16 %v399
  %v492 = vunpack.c.h.b16 %v399
  %v493 = vunpack.c.l.b16 %v400
  %v494 = vunpack.c.h.b16 %v400
  %v495 = vunpack.c.l.b16 %v401
  %v496 = vunpack.c.h.b16 %v401
  %v497 = vunpack.c.l.b16 %v402
  %v498 = vunpack.c.h.b16 %v402
  %v499 = vpack.c.b16 %v439, %v435
  %v500 = vpack.c.b16 %v440, %v436
  %v501 = vpack.c.b16 %v441, %v437
  %v502 = vpack.c.b16 %v442, %v438
  %v503 = vpack.c.b16 %v447, %v443
  %v504 = vpack.c.b16 %v448, %v444
  %v505 = vpack.c.b16 %v449, %v445
  %v506 = vpack.c.b16 %v450, %v446
  %v507 = vpack.c.b16 %v455, %v451
  %v508 = vpack.c.b16 %v456, %v452
  %v509 = vpack.c.b16 %v457, %v453
  %v510 = vpack.c.b16 %v458, %v454
  %v511 = vpack.c.b16 %v463, %v459
  %v512 = vpack.c.b16 %v464, %v460
  %v513 = vpack.c.b16 %v465, %v461
  %v514 = vpack.c.b16 %v466, %v462
  %v515 = vpack.c.b16 %v471, %v467
  %v516 = vpack.c.b16 %v472, %v468
  %v517 = vpack.c.b16 %v473, %v469
  %v518 = vpack.c.b16 %v474, %v470
  %v519 = vpack.c.b16 %v479, %v475
  %v520 = vpack.c.b16 %v480, %v476
  %v521 = vpack.c.b16 %v481, %v477
  %v522 = vpack.c.b16 %v482, %v478
  %v523 = vpack.c.b16 %v487, %v483
  %v524 = vpack.c.b16 %v488, %v484
  %v525 = vpack.c.b16 %v489, %v485
  %v526 = vpack.c.b16 %v490, %v486
  %v527 = vpack.c.b16 %v495, %v491
  %v528 = vpack.c.b16 %v496, %v492
  %v529 = vpack.c.b16 %v497, %v493
  %v530 = vpack.c.b16 %v498, %v494
  %563 = vmatprep.subr.bf16.mxu0 %v528
  %564 = vmatpush1.bf16.msra.mxu0 %v527
  %565 = vmatprep.subr.bf16.mxu0 %v524
  %566 = vmatpush1.bf16.msra.mxu0 %v523
  %567 = vmatprep.subr.bf16.mxu0 %v520
  %568 = vmatpush1.bf16.msra.mxu0 %v519
  %569 = vmatprep.subr.bf16.mxu0 %v516
  %570 = vmatpush1.bf16.msra.mxu0 %v515
  %571 = vmatprep.subr.bf16.mxu0 %v512
  %572 = vmatpush1.bf16.msra.mxu0 %v511
  %573 = vmatprep.subr.bf16.mxu0 %v508
  %574 = vmatpush1.bf16.msra.mxu0 %v507
  %575 = vmatprep.subr.bf16.mxu0 %v504
  %576 = vmatpush1.bf16.msra.mxu0 %v503
  %577 = vmatprep.subr.bf16.mxu0 %v500
  %578 = vmatpush1.bf16.msra.mxu0 %v499
  %579 = vmatprep.subr.bf16.mxu0 0
  %580 = vmatpush2.bf16.msra.mxu0 0
  %581 = vmatprep.subr.bf16.mxu0 0
  %582 = vmatpush2.bf16.msra.mxu0 0
  %583 = vmatprep.subr.bf16.mxu0 0
  %584 = vmatpush2.bf16.msra.mxu0 0
  %585 = vmatprep.subr.bf16.mxu0 0
  %586 = vmatpush2.bf16.msra.mxu0 0
  %587 = vmatprep.subr.bf16.mxu0 0
  %588 = vmatpush2.bf16.msra.mxu0 0
  %589 = vmatprep.subr.bf16.mxu0 0
  %590 = vmatpush2.bf16.msra.mxu0 0
  %591 = vmatprep.subr.bf16.mxu0 0
  %592 = vmatpush2.bf16.msra.mxu0 0
  %593 = vmatprep.subr.bf16.mxu0 0
  %594 = vmatpush2.bf16.msra.mxu0 0
  %595 = vmatprep.mubr.bf16.mxu0 0
  %596 = vmatmul.mubr.bf16.gmra.mxu0 0
  %v597 = vpop.f32.mrf.mxu0
  %v598 = vadd.f32 0.0, %v597
  %v599 = vpop.f32.mrf.mxu0
  %v600 = vadd.f32 0.0, %v599
  %v601 = vpop.f32.mrf.mxu0
  %v602 = vpop.f32.mrf.mxu0
  %603 = vdwg.mxu0
  %604 = vmatprep.subr.bf16.mxu0 %v530
  %605 = vmatpush1.bf16.msra.mxu0 %v529
  %606 = vmatprep.subr.bf16.mxu0 %v526
  %607 = vmatpush1.bf16.msra.mxu0 %v525
  %608 = vmatprep.subr.bf16.mxu0 %v522
  %609 = vmatpush1.bf16.msra.mxu0 %v521
  %610 = vmatprep.subr.bf16.mxu0 %v518
  %611 = vmatpush1.bf16.msra.mxu0 %v517
  %612 = vmatprep.subr.bf16.mxu0 %v514
  %613 = vmatpush1.bf16.msra.mxu0 %v513
  %614 = vmatprep.subr.bf16.mxu0 %v510
  %615 = vmatpush1.bf16.msra.mxu0 %v509
  %616 = vmatprep.subr.bf16.mxu0 %v506
  %617 = vmatpush1.bf16.msra.mxu0 %v505
  %618 = vmatprep.subr.bf16.mxu0 %v502
  %619 = vmatpush1.bf16.msra.mxu0 %v501
  %620 = vmatprep.subr.bf16.mxu0 0
  %621 = vmatpush2.bf16.msra.mxu0 0
  %622 = vmatprep.subr.bf16.mxu0 0
  %623 = vmatpush2.bf16.msra.mxu0 0
  %624 = vmatprep.subr.bf16.mxu0 0
  %625 = vmatpush2.bf16.msra.mxu0 0
  %626 = vmatprep.subr.bf16.mxu0 0
  %627 = vmatpush2.bf16.msra.mxu0 0
  %628 = vmatprep.subr.bf16.mxu0 0
  %629 = vmatpush2.bf16.msra.mxu0 0
  %630 = vmatprep.subr.bf16.mxu0 0
  %631 = vmatpush2.bf16.msra.mxu0 0
  %632 = vmatprep.subr.bf16.mxu0 0
  %633 = vmatpush2.bf16.msra.mxu0 0
  %634 = vmatprep.subr.bf16.mxu0 0
  %635 = vmatpush2.bf16.msra.mxu0 0
  %636 = vmatprep.mubr.bf16.mxu0 0
  %637 = vmatmul.mubr.bf16.gmra.mxu0 0
  %v638 = vpop.f32.mrf.mxu0
  %v639 = vadd.f32 0.0, %v638
  %v640 = vpop.f32.mrf.mxu0
  %v641 = vadd.f32 0.0, %v640
  %v642 = vpop.f32.mrf.mxu0
  %v643 = vpop.f32.mrf.mxu0
  %644 = vdwg.mxu0
  %v645 = vld [vmem:[#allocation2] sm:$0xff]
  %v646 = vld [vmem:[#allocation2 + $0x8] sm:$0xff]
  %v647 = vld [vmem:[#allocation2 + $0x10] sm:$0xff]
  %v648 = vld [vmem:[#allocation2 + $0x18] sm:$0xff]
  %v649 = vadd.f32 %v645, %v598
  %v650 = vadd.f32 %v646, %v600
  %v651 = vadd.f32 %v647, %v639
  %v652 = vadd.f32 %v648, %v641
  %v653 = vmul.f32 %v649, 0.5
  %v654 = vtanh.pop %v653
  %v655 = vmul.f32 %v654, 0.5
  %v656 = vadd.f32 %v655, 0.5
  %v657 = vmul.f32 %v650, 0.5
  %v658 = vtanh.pop %v657
  %v659 = vmul.f32 %v658, 0.5
  %v660 = vadd.f32 %v659, 0.5
  %v661 = vtanh.pop %v651
  %v662 = vmul.f32 %v652, 0.5
  %v663 = vtanh.pop %v662
  %v664 = vmul.f32 %v663, 0.5
  %v665 = vadd.f32 %v664, 0.5
  %v666 = vmul.f32 %v660, 0.0
  %v667 = vmul.f32 %v656, %v661
  %v668 = vadd.f32 %v666, %v667
  %v669 = vtanh.pop %v668
  %v670 = vmul.f32 %v665, %v669
  %v671 = vpack.c.bf16 %v670, %v670
  %672 = vmatprep.subr.bf16.mxu0 %v528
  %673 = vmatpush1.bf16.msra.mxu0 %v527
  %674 = vmatprep.subr.bf16.mxu0 %v524
  %675 = vmatpush1.bf16.msra.mxu0 %v523
  %676 = vmatprep.subr.bf16.mxu0 %v520
  %677 = vmatpush1.bf16.msra.mxu0 %v519
  %678 = vmatprep.subr.bf16.mxu0 %v516
  %679 = vmatpush1.bf16.msra.mxu0 %v515
  %680 = vmatprep.subr.bf16.mxu0 %v512
  %681 = vmatpush1.bf16.msra.mxu0 %v511
  %682 = vmatprep.subr.bf16.mxu0 %v508
  %683 = vmatpush1.bf16.msra.mxu0 %v507
  %684 = vmatprep.subr.bf16.mxu0 %v504
  %685 = vmatpush1.bf16.msra.mxu0 %v503
  %686 = vmatprep.subr.bf16.mxu0 %v500
  %687 = vmatpush1.bf16.msra.mxu0 %v499
  %688 = vmatprep.subr.bf16.mxu0 0
  %689 = vmatpush2.bf16.msra.mxu0 0
  %690 = vmatprep.subr.bf16.mxu0 0
  %691 = vmatpush2.bf16.msra.mxu0 0
  %692 = vmatprep.subr.bf16.mxu0 0
  %693 = vmatpush2.bf16.msra.mxu0 0
  %694 = vmatprep.subr.bf16.mxu0 0
  %695 = vmatpush2.bf16.msra.mxu0 0
  %696 = vmatprep.subr.bf16.mxu0 0
  %697 = vmatpush2.bf16.msra.mxu0 0
  %698 = vmatprep.subr.bf16.mxu0 0
  %699 = vmatpush2.bf16.msra.mxu0 0
  %700 = vmatprep.subr.bf16.mxu0 0
  %701 = vmatpush2.bf16.msra.mxu0 0
  %702 = vmatprep.subr.bf16.mxu0 0
  %703 = vmatpush2.bf16.msra.mxu0 0
  %704 = vmatprep.mubr.bf16.mxu0 0
  %705 = vmatmul.mubr.bf16.gmra.mxu0 %v671
  %v706 = vpop.f32.mrf.mxu0
  %v707 = vadd.f32 0.0, %v706
  %v708 = vpop.f32.mrf.mxu0
  %v709 = vadd.f32 0.0, %v708
  %v710 = vpop.f32.mrf.mxu0
  %v711 = vpop.f32.mrf.mxu0
  %712 = vdwg.mxu0
  %713 = vmatprep.subr.bf16.mxu0 %v530
  %714 = vmatpush1.bf16.msra.mxu0 %v529
  %715 = vmatprep.subr.bf16.mxu0 %v526
  %716 = vmatpush1.bf16.msra.mxu0 %v525
  %717 = vmatprep.subr.bf16.mxu0 %v522
  %718 = vmatpush1.bf16.msra.mxu0 %v521
  %719 = vmatprep.subr.bf16.mxu0 %v518
  %720 = vmatpush1.bf16.msra.mxu0 %v517
  %721 = vmatprep.subr.bf16.mxu0 %v514
  %722 = vmatpush1.bf16.msra.mxu0 %v513
  %723 = vmatprep.subr.bf16.mxu0 %v510
  %724 = vmatpush1.bf16.msra.mxu0 %v509
  %725 = vmatprep.subr.bf16.mxu0 %v506
  %726 = vmatpush1.bf16.msra.mxu0 %v505
  %727 = vmatprep.subr.bf16.mxu0 %v502
  %728 = vmatpush1.bf16.msra.mxu0 %v501
  %729 = vmatprep.subr.bf16.mxu0 0
  %730 = vmatpush2.bf16.msra.mxu0 0
  %731 = vmatprep.subr.bf16.mxu0 0
  %732 = vmatpush2.bf16.msra.mxu0 0
  %733 = vmatprep.subr.bf16.mxu0 0
  %734 = vmatpush2.bf16.msra.mxu0 0
  %735 = vmatprep.subr.bf16.mxu0 0
  %736 = vmatpush2.bf16.msra.mxu0 0
  %737 = vmatprep.subr.bf16.mxu0 0
  %738 = vmatpush2.bf16.msra.mxu0 0
  %739 = vmatprep.subr.bf16.mxu0 0
  %740 = vmatpush2.bf16.msra.mxu0 0
  %741 = vmatprep.subr.bf16.mxu0 0
  %742 = vmatpush2.bf16.msra.mxu0 0
  %743 = vmatprep.subr.bf16.mxu0 0
  %744 = vmatpush2.bf16.msra.mxu0 0
  %745 = vmatprep.mubr.bf16.mxu0 0
  %746 = vmatmul.mubr.bf16.gmra.mxu0 %v671
  %v747 = vpop.f32.mrf.mxu0
  %v748 = vadd.f32 0.0, %v747
  %v749 = vpop.f32.mrf.mxu0
  %v750 = vadd.f32 0.0, %v749
  %v751 = vpop.f32.mrf.mxu0
  %v752 = vpop.f32.mrf.mxu0
  %753 = vdwg.mxu0
  %v754 = vld [vmem:[#allocation2 + $0x20] sm:$0xff]
  %v755 = vld [vmem:[#allocation2 + $0x28] sm:$0xff]
  %v756 = vld [vmem:[#allocation2 + $0x30] sm:$0xff]
  %v757 = vld [vmem:[#allocation2 + $0x38] sm:$0xff]
  %v758 = vadd.f32 %v754, %v707
  %v759 = vadd.f32 %v755, %v709
  %v760 = vadd.f32 %v756, %v748
  %v761 = vadd.f32 %v757, %v750
  %v762 = vmul.f32 %v758, 0.5
  %v763 = vtanh.pop %v762
  %v764 = vmul.f32 %v763, 0.5
  %v765 = vadd.f32 %v764, 0.5
  %v766 = vmul.f32 %v759, 0.5
  %v767 = vtanh.pop %v766
  %v768 = vmul.f32 %v767, 0.5
  %v769 = vadd.f32 %v768, 0.5
  %v770 = vtanh.pop %v760
  %v771 = vmul.f32 %v761, 0.5
  %v772 = vtanh.pop %v771
  %v773 = vmul.f32 %v772, 0.5
  %v774 = vadd.f32 %v773, 0.5
  %v775 = vmul.f32 %v769, %v668
  %v776 = vmul.f32 %v765, %v770
  %v777 = vadd.f32 %v775, %v776
  %v778 = vtanh.pop %v777
  %v779 = vmul.f32 %v774, %v778
  %v780 = vpack.c.bf16 %v779, %v779
  %781 = vmatprep.subr.bf16.mxu0 %v528
  %782 = vmatpush1.bf16.msra.mxu0 %v527
  %783 = vmatprep.subr.bf16.mxu0 %v524
  %784 = vmatpush1.bf16.msra.mxu0 %v523
  %785 = vmatprep.subr.bf16.mxu0 %v520
  %786 = vmatpush1.bf16.msra.mxu0 %v519
  %787 = vmatprep.subr.bf16.mxu0 %v516
  %788 = vmatpush1.bf16.msra.mxu0 %v515
  %789 = vmatprep.subr.bf16.mxu0 %v512
  %790 = vmatpush1.bf16.msra.mxu0 %v511
  %791 = vmatprep.subr.bf16.mxu0 %v508
  %792 = vmatpush1.bf16.msra.mxu0 %v507
  %793 = vmatprep.subr.bf16.mxu0 %v504
  %794 = vmatpush1.bf16.msra.mxu0 %v503
  %795 = vmatprep.subr.bf16.mxu0 %v500
  %796 = vmatpush1.bf16.msra.mxu0 %v499
  %797 = vmatprep.subr.bf16.mxu0 0
  %798 = vmatpush2.bf16.msra.mxu0 0
  %799 = vmatprep.subr.bf16.mxu0 0
  %800 = vmatpush2.bf16.msra.mxu0 0
  %801 = vmatprep.subr.bf16.mxu0 0
  %802 = vmatpush2.bf16.msra.mxu0 0
  %803 = vmatprep.subr.bf16.mxu0 0
  %804 = vmatpush2.bf16.msra.mxu0 0
  %805 = vmatprep.subr.bf16.mxu0 0
  %806 = vmatpush2.bf16.msra.mxu0 0
  %807 = vmatprep.subr.bf16.mxu0 0
  %808 = vmatpush2.bf16.msra.mxu0 0
  %809 = vmatprep.subr.bf16.mxu0 0
  %810 = vmatpush2.bf16.msra.mxu0 0
  %811 = vmatprep.subr.bf16.mxu0 0
  %812 = vmatpush2.bf16.msra.mxu0 0
  %813 = vmatprep.mubr.bf16.mxu0 0
  %814 = vmatmul.mubr.bf16.gmra.mxu0 %v780
  %v815 = vpop.f32.mrf.mxu0
  %v816 = vadd.f32 0.0, %v815
  %v817 = vpop.f32.mrf.mxu0
  %v818 = vadd.f32 0.0, %v817
  %v819 = vpop.f32.mrf.mxu0
  %v820 = vpop.f32.mrf.mxu0
  %821 = vdwg.mxu0
  %822 = vmatprep.subr.bf16.mxu0 %v530
  %823 = vmatpush1.bf16.msra.mxu0 %v529
  %824 = vmatprep.subr.bf16.mxu0 %v526
  %825 = vmatpush1.bf16.msra.mxu0 %v525
  %826 = vmatprep.subr.bf16.mxu0 %v522
  %827 = vmatpush1.bf16.msra.mxu0 %v521
  %828 = vmatprep.subr.bf16.mxu0 %v518
  %829 = vmatpush1.bf16.msra.mxu0 %v517
  %830 = vmatprep.subr.bf16.mxu0 %v514
  %831 = vmatpush1.bf16.msra.mxu0 %v513
  %832 = vmatprep.subr.bf16.mxu0 %v510
  %833 = vmatpush1.bf16.msra.mxu0 %v509
  %834 = vmatprep.subr.bf16.mxu0 %v506
  %835 = vmatpush1.bf16.msra.mxu0 %v505
  %836 = vmatprep.subr.bf16.mxu0 %v502
  %837 = vmatpush1.bf16.msra.mxu0 %v501
  %838 = vmatprep.subr.bf16.mxu0 0
  %839 = vmatpush2.bf16.msra.mxu0 0
  %840 = vmatprep.subr.bf16.mxu0 0
  %841 = vmatpush2.bf16.msra.mxu0 0
  %842 = vmatprep.subr.bf16.mxu0 0
  %843 = vmatpush2.bf16.msra.mxu0 0
  %844 = vmatprep.subr.bf16.mxu0 0
  %845 = vmatpush2.bf16.msra.mxu0 0
  %846 = vmatprep.subr.bf16.mxu0 0
  %847 = vmatpush2.bf16.msra.mxu0 0
  %848 = vmatprep.subr.bf16.mxu0 0
  %849 = vmatpush2.bf16.msra.mxu0 0
  %850 = vmatprep.subr.bf16.mxu0 0
  %851 = vmatpush2.bf16.msra.mxu0 0
  %852 = vmatprep.subr.bf16.mxu0 0
  %853 = vmatpush2.bf16.msra.mxu0 0
  %854 = vmatprep.mubr.bf16.mxu0 0
  %855 = vmatmul.mubr.bf16.gmra.mxu0 %v780
  %v856 = vpop.f32.mrf.mxu0
  %v857 = vadd.f32 0.0, %v856
  %v858 = vpop.f32.mrf.mxu0
  %v859 = vadd.f32 0.0, %v858
  %v860 = vpop.f32.mrf.mxu0
  %v861 = vpop.f32.mrf.mxu0
  %862 = vdwg.mxu0
  %v863 = vld [vmem:[#allocation2 + $0x40] sm:$0xff]
  %v864 = vld [vmem:[#allocation2 + $0x48] sm:$0xff]
  %v865 = vld [vmem:[#allocation2 + $0x50] sm:$0xff]
  %v866 = vld [vmem:[#allocation2 + $0x58] sm:$0xff]
  %v867 = vadd.f32 %v863, %v816
  %v868 = vadd.f32 %v864, %v818
  %v869 = vadd.f32 %v865, %v857
  %v870 = vadd.f32 %v866, %v859
  %v871 = vmul.f32 %v867, 0.5
  %v872 = vtanh.pop %v871
  %v873 = vmul.f32 %v872, 0.5
  %v874 = vadd.f32 %v873, 0.5
  %v875 = vmul.f32 %v868, 0.5
  %v876 = vtanh.pop %v875
  %v877 = vmul.f32 %v876, 0.5
  %v878 = vadd.f32 %v877, 0.5
  %v879 = vtanh.pop %v869
  %v880 = vmul.f32 %v870, 0.5
  %v881 = vtanh.pop %v880
  %v882 = vmul.f32 %v881, 0.5
  %v883 = vadd.f32 %v882, 0.5
  %v884 = vmul.f32 %v878, %v777
  %v885 = vmul.f32 %v874, %v879
  %v886 = vadd.f32 %v884, %v885
  %v887 = vtanh.pop %v886
  %v888 = vmul.f32 %v883, %v887
  %v889 = vpack.c.bf16 %v888, %v888
  %890 = vmatprep.subr.bf16.mxu0 %v528
  %891 = vmatpush1.bf16.msra.mxu0 %v527
  %892 = vmatprep.subr.bf16.mxu0 %v524
  %893 = vmatpush1.bf16.msra.mxu0 %v523
  %894 = vmatprep.subr.bf16.mxu0 %v520
  %895 = vmatpush1.bf16.msra.mxu0 %v519
  %896 = vmatprep.subr.bf16.mxu0 %v516
  %897 = vmatpush1.bf16.msra.mxu0 %v515
  %898 = vmatprep.subr.bf16.mxu0 %v512
  %899 = vmatpush1.bf16.msra.mxu0 %v511
  %900 = vmatprep.subr.bf16.mxu0 %v508
  %901 = vmatpush1.bf16.msra.mxu0 %v507
  %902 = vmatprep.subr.bf16.mxu0 %v504
  %903 = vmatpush1.bf16.msra.mxu0 %v503
  %904 = vmatprep.subr.bf16.mxu0 %v500
  %905 = vmatpush1.bf16.msra.mxu0 %v499
  %906 = vmatprep.subr.bf16.mxu0 0
  %907 = vmatpush2.bf16.msra.mxu0 0
  %908 = vmatprep.subr.bf16.mxu0 0
  %909 = vmatpush2.bf16.msra.mxu0 0
  %910 = vmatprep.subr.bf16.mxu0 0
  %911 = vmatpush2.bf16.msra.mxu0 0
  %912 = vmatprep.subr.bf16.mxu0 0
  %913 = vmatpush2.bf16.msra.mxu0 0
  %914 = vmatprep.subr.bf16.mxu0 0
  %915 = vmatpush2.bf16.msra.mxu0 0
  %916 = vmatprep.subr.bf16.mxu0 0
  %917 = vmatpush2.bf16.msra.mxu0 0
  %918 = vmatprep.subr.bf16.mxu0 0
  %919 = vmatpush2.bf16.msra.mxu0 0
  %920 = vmatprep.subr.bf16.mxu0 0
  %921 = vmatpush2.bf16.msra.mxu0 0
  %922 = vmatprep.mubr.bf16.mxu0 0
  %923 = vmatmul.mubr.bf16.gmra.mxu0 %v889
  %v924 = vpop.f32.mrf.mxu0
  %v925 = vadd.f32 0.0, %v924
  %v926 = vpop.f32.mrf.mxu0
  %v927 = vadd.f32 0.0, %v926
  %v928 = vpop.f32.mrf.mxu0
  %v929 = vpop.f32.mrf.mxu0
  %930 = vdwg.mxu0
  %931 = vmatprep.subr.bf16.mxu0 %v530
  %932 = vmatpush1.bf16.msra.mxu0 %v529
  %933 = vmatprep.subr.bf16.mxu0 %v526
  %934 = vmatpush1.bf16.msra.mxu0 %v525
  %935 = vmatprep.subr.bf16.mxu0 %v522
  %936 = vmatpush1.bf16.msra.mxu0 %v521
  %937 = vmatprep.subr.bf16.mxu0 %v518
  %938 = vmatpush1.bf16.msra.mxu0 %v517
  %939 = vmatprep.subr.bf16.mxu0 %v514
  %940 = vmatpush1.bf16.msra.mxu0 %v513
  %941 = vmatprep.subr.bf16.mxu0 %v510
  %942 = vmatpush1.bf16.msra.mxu0 %v509
  %943 = vmatprep.subr.bf16.mxu0 %v506
  %944 = vmatpush1.bf16.msra.mxu0 %v505
  %945 = vmatprep.subr.bf16.mxu0 %v502
  %946 = vmatpush1.bf16.msra.mxu0 %v501
  %947 = vmatprep.subr.bf16.mxu0 0
  %948 = vmatpush2.bf16.msra.mxu0 0
  %949 = vmatprep.subr.bf16.mxu0 0
  %950 = vmatpush2.bf16.msra.mxu0 0
  %951 = vmatprep.subr.bf16.mxu0 0
  %952 = vmatpush2.bf16.msra.mxu0 0
  %953 = vmatprep.subr.bf16.mxu0 0
  %954 = vmatpush2.bf16.msra.mxu0 0
  %955 = vmatprep.subr.bf16.mxu0 0
  %956 = vmatpush2.bf16.msra.mxu0 0
  %957 = vmatprep.subr.bf16.mxu0 0
  %958 = vmatpush2.bf16.msra.mxu0 0
  %959 = vmatprep.subr.bf16.mxu0 0
  %960 = vmatpush2.bf16.msra.mxu0 0
  %961 = vmatprep.subr.bf16.mxu0 0
  %962 = vmatpush2.bf16.msra.mxu0 0
  %963 = vmatprep.mubr.bf16.mxu0 0
  %964 = vmatmul.mubr.bf16.gmra.mxu0 %v889
  %v965 = vpop.f32.mrf.mxu0
  %v966 = vadd.f32 0.0, %v965
  %v967 = vpop.f32.mrf.mxu0
  %v968 = vadd.f32 0.0, %v967
  %v969 = vpop.f32.mrf.mxu0
  %v970 = vpop.f32.mrf.mxu0
  %971 = vdwg.mxu0
  %v972 = vld [vmem:[#allocation2 + $0x60] sm:$0xff]
  %v973 = vld [vmem:[#allocation2 + $0x68] sm:$0xff]
  %v974 = vld [vmem:[#allocation2 + $0x70] sm:$0xff]
  %v975 = vld [vmem:[#allocation2 + $0x78] sm:$0xff]
  %v976 = vadd.f32 %v972, %v925
  %v977 = vadd.f32 %v973, %v927
  %v978 = vadd.f32 %v974, %v966
  %v979 = vadd.f32 %v975, %v968
  %v980 = vmul.f32 %v976, 0.5
  %v981 = vtanh.pop %v980
  %v982 = vmul.f32 %v981, 0.5
  %v983 = vadd.f32 %v982, 0.5
  %v984 = vmul.f32 %v977, 0.5
  %v985 = vtanh.pop %v984
  %v986 = vmul.f32 %v985, 0.5
  %v987 = vadd.f32 %v986, 0.5
  %v988 = vtanh.pop %v978
  %v989 = vmul.f32 %v979, 0.5
  %v990 = vtanh.pop %v989
  %v991 = vmul.f32 %v990, 0.5
  %v992 = vadd.f32 %v991, 0.5
  %v993 = vmul.f32 %v987, %v886
  %v994 = vmul.f32 %v983, %v988
  %v995 = vadd.f32 %v993, %v994
  %v996 = vtanh.pop %v995
  %v997 = vmul.f32 %v992, %v996
  %v998 = vpack.c.bf16 %v997, %v997
  %999 = vmatprep.subr.bf16.mxu0 %v528
  %1000 = vmatpush1.bf16.msra.mxu0 %v527
  %1001 = vmatprep.subr.bf16.mxu0 %v524
  %1002 = vmatpush1.bf16.msra.mxu0 %v523
  %1003 = vmatprep.subr.bf16.mxu0 %v520
  %1004 = vmatpush1.bf16.msra.mxu0 %v519
  %1005 = vmatprep.subr.bf16.mxu0 %v516
  %1006 = vmatpush1.bf16.msra.mxu0 %v515
  %1007 = vmatprep.subr.bf16.mxu0 %v512
  %1008 = vmatpush1.bf16.msra.mxu0 %v511
  %1009 = vmatprep.subr.bf16.mxu0 %v508
  %1010 = vmatpush1.bf16.msra.mxu0 %v507
  %1011 = vmatprep.subr.bf16.mxu0 %v504
  %1012 = vmatpush1.bf16.msra.mxu0 %v503
  %1013 = vmatprep.subr.bf16.mxu0 %v500
  %1014 = vmatpush1.bf16.msra.mxu0 %v499
  %1015 = vmatprep.subr.bf16.mxu0 0
  %1016 = vmatpush2.bf16.msra.mxu0 0
  %1017 = vmatprep.subr.bf16.mxu0 0
  %1018 = vmatpush2.bf16.msra.mxu0 0
  %1019 = vmatprep.subr.bf16.mxu0 0
  %1020 = vmatpush2.bf16.msra.mxu0 0
  %1021 = vmatprep.subr.bf16.mxu0 0
  %1022 = vmatpush2.bf16.msra.mxu0 0
  %1023 = vmatprep.subr.bf16.mxu0 0
  %1024 = vmatpush2.bf16.msra.mxu0 0
  %1025 = vmatprep.subr.bf16.mxu0 0
  %1026 = vmatpush2.bf16.msra.mxu0 0
  %1027 = vmatprep.subr.bf16.mxu0 0
  %1028 = vmatpush2.bf16.msra.mxu0 0
  %1029 = vmatprep.subr.bf16.mxu0 0
  %1030 = vmatpush2.bf16.msra.mxu0 0
  %1031 = vmatprep.mubr.bf16.mxu0 0
  %1032 = vmatmul.mubr.bf16.gmra.mxu0 %v998
  %v1033 = vpop.f32.mrf.mxu0
  %v1034 = vadd.f32 0.0, %v1033
  %v1035 = vpop.f32.mrf.mxu0
  %v1036 = vadd.f32 0.0, %v1035
  %v1037 = vpop.f32.mrf.mxu0
  %v1038 = vpop.f32.mrf.mxu0
  %1039 = vdwg.mxu0
  %1040 = vmatprep.subr.bf16.mxu0 %v530
  %1041 = vmatpush1.bf16.msra.mxu0 %v529
  %1042 = vmatprep.subr.bf16.mxu0 %v526
  %1043 = vmatpush1.bf16.msra.mxu0 %v525
  %1044 = vmatprep.subr.bf16.mxu0 %v522
  %1045 = vmatpush1.bf16.msra.mxu0 %v521
  %1046 = vmatprep.subr.bf16.mxu0 %v518
  %1047 = vmatpush1.bf16.msra.mxu0 %v517
  %1048 = vmatprep.subr.bf16.mxu0 %v514
  %1049 = vmatpush1.bf16.msra.mxu0 %v513
  %1050 = vmatprep.subr.bf16.mxu0 %v510
  %1051 = vmatpush1.bf16.msra.mxu0 %v509
  %1052 = vmatprep.subr.bf16.mxu0 %v506
  %1053 = vmatpush1.bf16.msra.mxu0 %v505
  %1054 = vmatprep.subr.bf16.mxu0 %v502
  %1055 = vmatpush1.bf16.msra.mxu0 %v501
  %1056 = vmatprep.subr.bf16.mxu0 0
  %1057 = vmatpush2.bf16.msra.mxu0 0
  %1058 = vmatprep.subr.bf16.mxu0 0
  %1059 = vmatpush2.bf16.msra.mxu0 0
  %1060 = vmatprep.subr.bf16.mxu0 0
  %1061 = vmatpush2.bf16.msra.mxu0 0
  %1062 = vmatprep.subr.bf16.mxu0 0
  %1063 = vmatpush2.bf16.msra.mxu0 0
  %1064 = vmatprep.subr.bf16.mxu0 0
  %1065 = vmatpush2.bf16.msra.mxu0 0
  %1066 = vmatprep.subr.bf16.mxu0 0
  %1067 = vmatpush2.bf16.msra.mxu0 0
  %1068 = vmatprep.subr.bf16.mxu0 0
  %1069 = vmatpush2.bf16.msra.mxu0 0
  %1070 = vmatprep.subr.bf16.mxu0 0
  %1071 = vmatpush2.bf16.msra.mxu0 0
  %1072 = vmatprep.mubr.bf16.mxu0 0
  %1073 = vmatmul.mubr.bf16.gmra.mxu0 %v998
  %v1074 = vpop.f32.mrf.mxu0
  %v1075 = vadd.f32 0.0, %v1074
  %v1076 = vpop.f32.mrf.mxu0
  %v1077 = vadd.f32 0.0, %v1076
  %v1078 = vpop.f32.mrf.mxu0
  %v1079 = vpop.f32.mrf.mxu0
  %1080 = vdwg.mxu0
  %v1081 = vld [vmem:[#allocation2 + $0x80] sm:$0xff]
  %v1082 = vld [vmem:[#allocation2 + $0x88] sm:$0xff]
  %v1083 = vld [vmem:[#allocation2 + $0x90] sm:$0xff]
  %v1084 = vld [vmem:[#allocation2 + $0x98] sm:$0xff]
  %v1085 = vadd.f32 %v1081, %v1034
  %v1086 = vadd.f32 %v1082, %v1036
  %v1087 = vadd.f32 %v1083, %v1075
  %v1088 = vadd.f32 %v1084, %v1077
  %v1089 = vmul.f32 %v1085, 0.5
  %v1090 = vtanh.pop %v1089
  %v1091 = vmul.f32 %v1090, 0.5
  %v1092 = vadd.f32 %v1091, 0.5
  %v1093 = vmul.f32 %v1086, 0.5
  %v1094 = vtanh.pop %v1093
  %v1095 = vmul.f32 %v1094, 0.5
  %v1096 = vadd.f32 %v1095, 0.5
  %v1097 = vtanh.pop %v1087
  %v1098 = vmul.f32 %v1088, 0.5
  %v1099 = vtanh.pop %v1098
  %v1100 = vmul.f32 %v1099, 0.5
  %v1101 = vadd.f32 %v1100, 0.5
  %v1102 = vmul.f32 %v1096, %v995
  %v1103 = vmul.f32 %v1092, %v1097
  %v1104 = vadd.f32 %v1102, %v1103
  %v1105 = vtanh.pop %v1104
  %v1106 = vmul.f32 %v1101, %v1105
  %v1107 = vpack.c.bf16 %v1106, %v1106
  %1108 = vmatprep.subr.bf16.mxu0 %v528
  %1109 = vmatpush1.bf16.msra.mxu0 %v527
  %1110 = vmatprep.subr.bf16.mxu0 %v524
  %1111 = vmatpush1.bf16.msra.mxu0 %v523
  %1112 = vmatprep.subr.bf16.mxu0 %v520
  %1113 = vmatpush1.bf16.msra.mxu0 %v519
  %1114 = vmatprep.subr.bf16.mxu0 %v516
  %1115 = vmatpush1.bf16.msra.mxu0 %v515
  %1116 = vmatprep.subr.bf16.mxu0 %v512
  %1117 = vmatpush1.bf16.msra.mxu0 %v511
  %1118 = vmatprep.subr.bf16.mxu0 %v508
  %1119 = vmatpush1.bf16.msra.mxu0 %v507
  %1120 = vmatprep.subr.bf16.mxu0 %v504
  %1121 = vmatpush1.bf16.msra.mxu0 %v503
  %1122 = vmatprep.subr.bf16.mxu0 %v500
  %1123 = vmatpush1.bf16.msra.mxu0 %v499
  %1124 = vmatprep.subr.bf16.mxu0 0
  %1125 = vmatpush2.bf16.msra.mxu0 0
  %1126 = vmatprep.subr.bf16.mxu0 0
  %1127 = vmatpush2.bf16.msra.mxu0 0
  %1128 = vmatprep.subr.bf16.mxu0 0
  %1129 = vmatpush2.bf16.msra.mxu0 0
  %1130 = vmatprep.subr.bf16.mxu0 0
  %1131 = vmatpush2.bf16.msra.mxu0 0
  %1132 = vmatprep.subr.bf16.mxu0 0
  %1133 = vmatpush2.bf16.msra.mxu0 0
  %1134 = vmatprep.subr.bf16.mxu0 0
  %1135 = vmatpush2.bf16.msra.mxu0 0
  %1136 = vmatprep.subr.bf16.mxu0 0
  %1137 = vmatpush2.bf16.msra.mxu0 0
  %1138 = vmatprep.subr.bf16.mxu0 0
  %1139 = vmatpush2.bf16.msra.mxu0 0
  %1140 = vmatprep.mubr.bf16.mxu0 0
  %1141 = vmatmul.mubr.bf16.gmra.mxu0 %v1107
  %v1142 = vpop.f32.mrf.mxu0
  %v1143 = vadd.f32 0.0, %v1142
  %v1144 = vpop.f32.mrf.mxu0
  %v1145 = vadd.f32 0.0, %v1144
  %v1146 = vpop.f32.mrf.mxu0
  %v1147 = vpop.f32.mrf.mxu0
  %1148 = vdwg.mxu0
  %1149 = vmatprep.subr.bf16.mxu0 %v530
  %1150 = vmatpush1.bf16.msra.mxu0 %v529
  %1151 = vmatprep.subr.bf16.mxu0 %v526
  %1152 = vmatpush1.bf16.msra.mxu0 %v525
  %1153 = vmatprep.subr.bf16.mxu0 %v522
  %1154 = vmatpush1.bf16.msra.mxu0 %v521
  %1155 = vmatprep.subr.bf16.mxu0 %v518
  %1156 = vmatpush1.bf16.msra.mxu0 %v517
  %1157 = vmatprep.subr.bf16.mxu0 %v514
  %1158 = vmatpush1.bf16.msra.mxu0 %v513
  %1159 = vmatprep.subr.bf16.mxu0 %v510
  %1160 = vmatpush1.bf16.msra.mxu0 %v509
  %1161 = vmatprep.subr.bf16.mxu0 %v506
  %1162 = vmatpush1.bf16.msra.mxu0 %v505
  %1163 = vmatprep.subr.bf16.mxu0 %v502
  %1164 = vmatpush1.bf16.msra.mxu0 %v501
  %1165 = vmatprep.subr.bf16.mxu0 0
  %1166 = vmatpush2.bf16.msra.mxu0 0
  %1167 = vmatprep.subr.bf16.mxu0 0
  %1168 = vmatpush2.bf16.msra.mxu0 0
  %1169 = vmatprep.subr.bf16.mxu0 0
  %1170 = vmatpush2.bf16.msra.mxu0 0
  %1171 = vmatprep.subr.bf16.mxu0 0
  %1172 = vmatpush2.bf16.msra.mxu0 0
  %1173 = vmatprep.subr.bf16.mxu0 0
  %1174 = vmatpush2.bf16.msra.mxu0 0
  %1175 = vmatprep.subr.bf16.mxu0 0
  %1176 = vmatpush2.bf16.msra.mxu0 0
  %1177 = vmatprep.subr.bf16.mxu0 0
  %1178 = vmatpush2.bf16.msra.mxu0 0
  %1179 = vmatprep.subr.bf16.mxu0 0
  %1180 = vmatpush2.bf16.msra.mxu0 0
  %1181 = vmatprep.mubr.bf16.mxu0 0
  %1182 = vmatmul.mubr.bf16.gmra.mxu0 %v1107
  %v1183 = vpop.f32.mrf.mxu0
  %v1184 = vadd.f32 0.0, %v1183
  %v1185 = vpop.f32.mrf.mxu0
  %v1186 = vadd.f32 0.0, %v1185
  %v1187 = vpop.f32.mrf.mxu0
  %v1188 = vpop.f32.mrf.mxu0
  %1189 = vdwg.mxu0
  %v1190 = vld [vmem:[#allocation2 + $0xa0] sm:$0xff]
  %v1191 = vld [vmem:[#allocation2 + $0xa8] sm:$0xff]
  %v1192 = vld [vmem:[#allocation2 + $0xb0] sm:$0xff]
  %v1193 = vld [vmem:[#allocation2 + $0xb8] sm:$0xff]
  %v1194 = vadd.f32 %v1190, %v1143
  %v1195 = vadd.f32 %v1191, %v1145
  %v1196 = vadd.f32 %v1192, %v1184
  %v1197 = vadd.f32 %v1193, %v1186
  %v1198 = vmul.f32 %v1194, 0.5
  %v1199 = vtanh.pop %v1198
  %v1200 = vmul.f32 %v1199, 0.5
  %v1201 = vadd.f32 %v1200, 0.5
  %v1202 = vmul.f32 %v1195, 0.5
  %v1203 = vtanh.pop %v1202
  %v1204 = vmul.f32 %v1203, 0.5
  %v1205 = vadd.f32 %v1204, 0.5
  %v1206 = vtanh.pop %v1196
  %v1207 = vmul.f32 %v1197, 0.5
  %v1208 = vtanh.pop %v1207
  %v1209 = vmul.f32 %v1208, 0.5
  %v1210 = vadd.f32 %v1209, 0.5
  %v1211 = vmul.f32 %v1205, %v1104
  %v1212 = vmul.f32 %v1201, %v1206
  %v1213 = vadd.f32 %v1211, %v1212
  %v1214 = vtanh.pop %v1213
  %v1215 = vmul.f32 %v1210, %v1214
  %v1216 = vpack.c.bf16 %v1215, %v1215
  %1217 = vmatprep.subr.bf16.mxu0 %v528
  %1218 = vmatpush1.bf16.msra.mxu0 %v527
  %1219 = vmatprep.subr.bf16.mxu0 %v524
  %1220 = vmatpush1.bf16.msra.mxu0 %v523
  %1221 = vmatprep.subr.bf16.mxu0 %v520
  %1222 = vmatpush1.bf16.msra.mxu0 %v519
  %1223 = vmatprep.subr.bf16.mxu0 %v516
  %1224 = vmatpush1.bf16.msra.mxu0 %v515
  %1225 = vmatprep.subr.bf16.mxu0 %v512
  %1226 = vmatpush1.bf16.msra.mxu0 %v511
  %1227 = vmatprep.subr.bf16.mxu0 %v508
  %1228 = vmatpush1.bf16.msra.mxu0 %v507
  %1229 = vmatprep.subr.bf16.mxu0 %v504
  %1230 = vmatpush1.bf16.msra.mxu0 %v503
  %1231 = vmatprep.subr.bf16.mxu0 %v500
  %1232 = vmatpush1.bf16.msra.mxu0 %v499
  %1233 = vmatprep.subr.bf16.mxu0 0
  %1234 = vmatpush2.bf16.msra.mxu0 0
  %1235 = vmatprep.subr.bf16.mxu0 0
  %1236 = vmatpush2.bf16.msra.mxu0 0
  %1237 = vmatprep.subr.bf16.mxu0 0
  %1238 = vmatpush2.bf16.msra.mxu0 0
  %1239 = vmatprep.subr.bf16.mxu0 0
  %1240 = vmatpush2.bf16.msra.mxu0 0
  %1241 = vmatprep.subr.bf16.mxu0 0
  %1242 = vmatpush2.bf16.msra.mxu0 0
  %1243 = vmatprep.subr.bf16.mxu0 0
  %1244 = vmatpush2.bf16.msra.mxu0 0
  %1245 = vmatprep.subr.bf16.mxu0 0
  %1246 = vmatpush2.bf16.msra.mxu0 0
  %1247 = vmatprep.subr.bf16.mxu0 0
  %1248 = vmatpush2.bf16.msra.mxu0 0
  %1249 = vmatprep.mubr.bf16.mxu0 0
  %1250 = vmatmul.mubr.bf16.gmra.mxu0 %v1216
  %v1251 = vpop.f32.mrf.mxu0
  %v1252 = vadd.f32 0.0, %v1251
  %v1253 = vpop.f32.mrf.mxu0
  %v1254 = vadd.f32 0.0, %v1253
  %v1255 = vpop.f32.mrf.mxu0
  %v1256 = vpop.f32.mrf.mxu0
  %1257 = vdwg.mxu0
  %1258 = vmatprep.subr.bf16.mxu0 %v530
  %1259 = vmatpush1.bf16.msra.mxu0 %v529
  %1260 = vmatprep.subr.bf16.mxu0 %v526
  %1261 = vmatpush1.bf16.msra.mxu0 %v525
  %1262 = vmatprep.subr.bf16.mxu0 %v522
  %1263 = vmatpush1.bf16.msra.mxu0 %v521
  %1264 = vmatprep.subr.bf16.mxu0 %v518
  %1265 = vmatpush1.bf16.msra.mxu0 %v517
  %1266 = vmatprep.subr.bf16.mxu0 %v514
  %1267 = vmatpush1.bf16.msra.mxu0 %v513
  %1268 = vmatprep.subr.bf16.mxu0 %v510
  %1269 = vmatpush1.bf16.msra.mxu0 %v509
  %1270 = vmatprep.subr.bf16.mxu0 %v506
  %1271 = vmatpush1.bf16.msra.mxu0 %v505
  %1272 = vmatprep.subr.bf16.mxu0 %v502
  %1273 = vmatpush1.bf16.msra.mxu0 %v501
  %1274 = vmatprep.subr.bf16.mxu0 0
  %1275 = vmatpush2.bf16.msra.mxu0 0
  %1276 = vmatprep.subr.bf16.mxu0 0
  %1277 = vmatpush2.bf16.msra.mxu0 0
  %1278 = vmatprep.subr.bf16.mxu0 0
  %1279 = vmatpush2.bf16.msra.mxu0 0
  %1280 = vmatprep.subr.bf16.mxu0 0
  %1281 = vmatpush2.bf16.msra.mxu0 0
  %1282 = vmatprep.subr.bf16.mxu0 0
  %1283 = vmatpush2.bf16.msra.mxu0 0
  %1284 = vmatprep.subr.bf16.mxu0 0
  %1285 = vmatpush2.bf16.msra.mxu0 0
  %1286 = vmatprep.subr.bf16.mxu0 0
  %1287 = vmatpush2.bf16.msra.mxu0 0
  %1288 = vmatprep.subr.bf16.mxu0 0
  %1289 = vmatpush2.bf16.msra.mxu0 0
  %1290 = vmatprep.mubr.bf16.mxu0 0
  %1291 = vmatmul.mubr.bf16.gmra.mxu0 %v1216
  %v1292 = vpop.f32.mrf.mxu0
  %v1293 = vadd.f32 0.0, %v1292
  %v1294 = vpop.f32.mrf.mxu0
  %v1295 = vadd.f32 0.0, %v1294
  %v1296 = vpop.f32.mrf.mxu0
  %v1297 = vpop.f32.mrf.mxu0
  %1298 = vdwg.mxu0
  %v1299 = vld [vmem:[#allocation2 + $0xc0] sm:$0xff]
  %v1300 = vld [vmem:[#allocation2 + $0xc8] sm:$0xff]
  %v1301 = vld [vmem:[#allocation2 + $0xd0] sm:$0xff]
  %v1302 = vld [vmem:[#allocation2 + $0xd8] sm:$0xff]
  %v1303 = vadd.f32 %v1299, %v1252
  %v1304 = vadd.f32 %v1300, %v1254
  %v1305 = vadd.f32 %v1301, %v1293
  %v1306 = vadd.f32 %v1302, %v1295
  %v1307 = vmul.f32 %v1303, 0.5
  %v1308 = vtanh.pop %v1307
  %v1309 = vmul.f32 %v1308, 0.5
  %v1310 = vadd.f32 %v1309, 0.5
  %v1311 = vmul.f32 %v1304, 0.5
  %v1312 = vtanh.pop %v1311
  %v1313 = vmul.f32 %v1312, 0.5
  %v1314 = vadd.f32 %v1313, 0.5
  %v1315 = vtanh.pop %v1305
  %v1316 = vmul.f32 %v1306, 0.5
  %v1317 = vtanh.pop %v1316
  %v1318 = vmul.f32 %v1317, 0.5
  %v1319 = vadd.f32 %v1318, 0.5
  %v1320 = vmul.f32 %v1314, %v1213
  %v1321 = vmul.f32 %v1310, %v1315
  %v1322 = vadd.f32 %v1320, %v1321
  %v1323 = vtanh.pop %v1322
  %v1324 = vmul.f32 %v1319, %v1323
  %v1325 = vpack.c.bf16 %v1324, %v1324
  %1326 = vmatprep.subr.bf16.mxu0 %v528
  %1327 = vmatpush1.bf16.msra.mxu0 %v527
  %1328 = vmatprep.subr.bf16.mxu0 %v524
  %1329 = vmatpush1.bf16.msra.mxu0 %v523
  %1330 = vmatprep.subr.bf16.mxu0 %v520
  %1331 = vmatpush1.bf16.msra.mxu0 %v519
  %1332 = vmatprep.subr.bf16.mxu0 %v516
  %1333 = vmatpush1.bf16.msra.mxu0 %v515
  %1334 = vmatprep.subr.bf16.mxu0 %v512
  %1335 = vmatpush1.bf16.msra.mxu0 %v511
  %1336 = vmatprep.subr.bf16.mxu0 %v508
  %1337 = vmatpush1.bf16.msra.mxu0 %v507
  %1338 = vmatprep.subr.bf16.mxu0 %v504
  %1339 = vmatpush1.bf16.msra.mxu0 %v503
  %1340 = vmatprep.subr.bf16.mxu0 %v500
  %1341 = vmatpush1.bf16.msra.mxu0 %v499
  %1342 = vmatprep.subr.bf16.mxu0 0
  %1343 = vmatpush2.bf16.msra.mxu0 0
  %1344 = vmatprep.subr.bf16.mxu0 0
  %1345 = vmatpush2.bf16.msra.mxu0 0
  %1346 = vmatprep.subr.bf16.mxu0 0
  %1347 = vmatpush2.bf16.msra.mxu0 0
  %1348 = vmatprep.subr.bf16.mxu0 0
  %1349 = vmatpush2.bf16.msra.mxu0 0
  %1350 = vmatprep.subr.bf16.mxu0 0
  %1351 = vmatpush2.bf16.msra.mxu0 0
  %1352 = vmatprep.subr.bf16.mxu0 0
  %1353 = vmatpush2.bf16.msra.mxu0 0
  %1354 = vmatprep.subr.bf16.mxu0 0
  %1355 = vmatpush2.bf16.msra.mxu0 0
  %1356 = vmatprep.subr.bf16.mxu0 0
  %1357 = vmatpush2.bf16.msra.mxu0 0
  %1358 = vmatprep.mubr.bf16.mxu0 0
  %1359 = vmatmul.mubr.bf16.gmra.mxu0 %v1325
  %v1360 = vpop.f32.mrf.mxu0
  %v1361 = vadd.f32 0.0, %v1360
  %v1362 = vpop.f32.mrf.mxu0
  %v1363 = vadd.f32 0.0, %v1362
  %v1364 = vpop.f32.mrf.mxu0
  %v1365 = vpop.f32.mrf.mxu0
  %1366 = vdwg.mxu0
  %1367 = vmatprep.subr.bf16.mxu0 %v530
  %1368 = vmatpush1.bf16.msra.mxu0 %v529
  %1369 = vmatprep.subr.bf16.mxu0 %v526
  %1370 = vmatpush1.bf16.msra.mxu0 %v525
  %1371 = vmatprep.subr.bf16.mxu0 %v522
  %1372 = vmatpush1.bf16.msra.mxu0 %v521
  %1373 = vmatprep.subr.bf16.mxu0 %v518
  %1374 = vmatpush1.bf16.msra.mxu0 %v517
  %1375 = vmatprep.subr.bf16.mxu0 %v514
  %1376 = vmatpush1.bf16.msra.mxu0 %v513
  %1377 = vmatprep.subr.bf16.mxu0 %v510
  %1378 = vmatpush1.bf16.msra.mxu0 %v509
  %1379 = vmatprep.subr.bf16.mxu0 %v506
  %1380 = vmatpush1.bf16.msra.mxu0 %v505
  %1381 = vmatprep.subr.bf16.mxu0 %v502
  %1382 = vmatpush1.bf16.msra.mxu0 %v501
  %1383 = vmatprep.subr.bf16.mxu0 0
  %1384 = vmatpush2.bf16.msra.mxu0 0
  %1385 = vmatprep.subr.bf16.mxu0 0
  %1386 = vmatpush2.bf16.msra.mxu0 0
  %1387 = vmatprep.subr.bf16.mxu0 0
  %1388 = vmatpush2.bf16.msra.mxu0 0
  %1389 = vmatprep.subr.bf16.mxu0 0
  %1390 = vmatpush2.bf16.msra.mxu0 0
  %1391 = vmatprep.subr.bf16.mxu0 0
  %1392 = vmatpush2.bf16.msra.mxu0 0
  %1393 = vmatprep.subr.bf16.mxu0 0
  %1394 = vmatpush2.bf16.msra.mxu0 0
  %1395 = vmatprep.subr.bf16.mxu0 0
  %1396 = vmatpush2.bf16.msra.mxu0 0
  %1397 = vmatprep.subr.bf16.mxu0 0
  %1398 = vmatpush2.bf16.msra.mxu0 0
  %1399 = vmatprep.mubr.bf16.mxu0 0
  %1400 = vmatmul.mubr.bf16.gmra.mxu0 %v1325
  %v1401 = vpop.f32.mrf.mxu0
  %v1402 = vadd.f32 0.0, %v1401
  %v1403 = vpop.f32.mrf.mxu0
  %v1404 = vadd.f32 0.0, %v1403
  %v1405 = vpop.f32.mrf.mxu0
  %v1406 = vpop.f32.mrf.mxu0
  %1407 = vdwg.mxu0
  %v1408 = vld [vmem:[#allocation2 + $0xe0] sm:$0xff]
  %v1409 = vld [vmem:[#allocation2 + $0xe8] sm:$0xff]
  %v1410 = vld [vmem:[#allocation2 + $0xf0] sm:$0xff]
  %v1411 = vld [vmem:[#allocation2 + $0xf8] sm:$0xff]
  %v1412 = vadd.f32 %v1408, %v1361
  %v1413 = vadd.f32 %v1409, %v1363
  %v1414 = vadd.f32 %v1410, %v1402
  %v1415 = vadd.f32 %v1411, %v1404
  %v1416 = vmul.f32 %v1412, 0.5
  %v1417 = vtanh.pop %v1416
  %v1418 = vmul.f32 %v1417, 0.5
  %v1419 = vadd.f32 %v1418, 0.5
  %v1420 = vmul.f32 %v1413, 0.5
  %v1421 = vtanh.pop %v1420
  %v1422 = vmul.f32 %v1421, 0.5
  %v1423 = vadd.f32 %v1422, 0.5
  %v1424 = vtanh.pop %v1414
  %v1425 = vmul.f32 %v1415, 0.5
  %v1426 = vtanh.pop %v1425
  %v1427 = vmul.f32 %v1426, 0.5
  %v1428 = vadd.f32 %v1427, 0.5
  %v1429 = vmul.f32 %v1423, %v1322
  %v1430 = vmul.f32 %v1419, %v1424
  %v1431 = vadd.f32 %v1429, %v1430
  %v1432 = vtanh.pop %v1431
  %v1433 = vmul.f32 %v1428, %v1432
  %v1434 = vld [vmem:[%s4] sm:$0xff]
  %v1435 = vld [vmem:[%s4 + $0x8] sm:$0xff]
  %v1436 = vld [vmem:[%s4 + $0x10] sm:$0xff]
  %v1437 = vld [vmem:[%s4 + $0x18] sm:$0xff]
  %v1438 = vld [vmem:[%s4 + $0x20] sm:$0xff]
  %v1439 = vld [vmem:[%s4 + $0x28] sm:$0xff]
  %v1440 = vld [vmem:[%s4 + $0x30] sm:$0xff]
  %v1441 = vld [vmem:[%s4 + $0x38] sm:$0xff]
  %v1442 = vld [vmem:[%s4 + $0x40] sm:$0xff]
  %v1443 = vld [vmem:[%s4 + $0x48] sm:$0xff]
  %v1444 = vld [vmem:[%s4 + $0x50] sm:$0xff]
  %v1445 = vld [vmem:[%s4 + $0x58] sm:$0xff]
  %v1446 = vld [vmem:[%s4 + $0x60] sm:$0xff]
  %v1447 = vld [vmem:[%s4 + $0x68] sm:$0xff]
  %v1448 = vld [vmem:[%s4 + $0x70] sm:$0xff]
  %v1449 = vld [vmem:[%s4 + $0x78] sm:$0xff]
  %v1450 = vld [vmem:[%s5] sm:$0x1]
  %v1452 = vlaneseq
  %v1453 = vshrl.u32 %v1452, 7
  %v1454 = vsub.s32 0, %v1453
  %v1455 = vrot.slane %v1450, %v1454
  %1457 = vmatprep.subr.mxu0 0.0
  %1458 = vmatpush1.msra.mxu0 %v1449
  %1459 = vmatprep.subr.mxu0 0.0
  %1460 = vmatpush1.msra.mxu0 %v1448
  %1461 = vmatprep.subr.mxu0 0.0
  %1462 = vmatpush1.msra.mxu0 %v1447
  %1463 = vmatprep.subr.mxu0 0.0
  %1464 = vmatpush1.msra.mxu0 %v1446
  %1465 = vmatprep.subr.mxu0 0.0
  %1466 = vmatpush1.msra.mxu0 %v1445
  %1467 = vmatprep.subr.mxu0 0.0
  %1468 = vmatpush1.msra.mxu0 %v1444
  %1469 = vmatprep.subr.mxu0 0.0
  %1470 = vmatpush1.msra.mxu0 %v1443
  %1471 = vmatprep.subr.mxu0 0.0
  %1472 = vmatpush1.msra.mxu0 %v1442
  %1473 = vmatprep.subr.mxu0 0.0
  %1474 = vmatpush1.msra.mxu0 %v1441
  %1475 = vmatprep.subr.mxu0 0.0
  %1476 = vmatpush1.msra.mxu0 %v1440
  %1477 = vmatprep.subr.mxu0 0.0
  %1478 = vmatpush1.msra.mxu0 %v1439
  %1479 = vmatprep.subr.mxu0 0.0
  %1480 = vmatpush1.msra.mxu0 %v1438
  %1481 = vmatprep.subr.mxu0 0.0
  %1482 = vmatpush1.msra.mxu0 %v1437
  %1483 = vmatprep.subr.mxu0 0.0
  %1484 = vmatpush1.msra.mxu0 %v1436
  %1485 = vmatprep.subr.mxu0 0.0
  %1486 = vmatpush1.msra.mxu0 %v1435
  %1487 = vmatprep.subr.mxu0 0.0
  %1488 = vmatpush1.msra.mxu0 %v1434
  %1489 = vmatprep.subr.mxu0 0.0
  %1490 = vmatpush2.msra.mxu0 0.0
  %1491 = vmatprep.subr.mxu0 0.0
  %1492 = vmatpush2.msra.mxu0 0.0
  %1493 = vmatprep.subr.mxu0 0.0
  %1494 = vmatpush2.msra.mxu0 0.0
  %1495 = vmatprep.subr.mxu0 0.0
  %1496 = vmatpush2.msra.mxu0 0.0
  %1497 = vmatprep.subr.mxu0 0.0
  %1498 = vmatpush2.msra.mxu0 0.0
  %1499 = vmatprep.subr.mxu0 0.0
  %1500 = vmatpush2.msra.mxu0 0.0
  %1501 = vmatprep.subr.mxu0 0.0
  %1502 = vmatpush2.msra.mxu0 0.0
  %1503 = vmatprep.subr.mxu0 0.0
  %1504 = vmatpush2.msra.mxu0 0.0
  %1505 = vmatprep.subr.mxu0 0.0
  %1506 = vmatpush2.msra.mxu0 0.0
  %1507 = vmatprep.subr.mxu0 0.0
  %1508 = vmatpush2.msra.mxu0 0.0
  %1509 = vmatprep.subr.mxu0 0.0
  %1510 = vmatpush2.msra.mxu0 0.0
  %1511 = vmatprep.subr.mxu0 0.0
  %1512 = vmatpush2.msra.mxu0 0.0
  %1513 = vmatprep.subr.mxu0 0.0
  %1514 = vmatpush2.msra.mxu0 0.0
  %1515 = vmatprep.subr.mxu0 0.0
  %1516 = vmatpush2.msra.mxu0 0.0
  %1517 = vmatprep.subr.mxu0 0.0
  %1518 = vmatpush2.msra.mxu0 0.0
  %1519 = vmatprep.subr.mxu0 0.0
  %1520 = vmatpush2.msra.mxu0 0.0
  %1521 = vmatprep.mubr.f32.mxu0 0.0
  %1522 = vmatmul.mubr.f32.gmra.mxu0 %v1433
  %v1523 = vpop.f32.mrf.mxu0
  %v1524 = vadd.f32 %v1455, %v1523
  %v1525 = vpop.f32.mrf.mxu0
  %1526 = vdwg.mxu0
  %v1527 = vmax.f32 %v1524, 0.0
  %v1528 = vld [vmem:[%s6] sm:$0xff]
  %v1529 = vld [vmem:[%s6 + $0x8] sm:$0xff]
  %v1530 = vld [vmem:[%s6 + $0x10] sm:$0xff]
  %v1531 = vld [vmem:[%s6 + $0x18] sm:$0xff]
  %v1532 = vld [vmem:[%s6 + $0x20] sm:$0xff]
  %v1533 = vld [vmem:[%s6 + $0x28] sm:$0xff]
  %v1534 = vld [vmem:[%s6 + $0x30] sm:$0xff]
  %v1535 = vld [vmem:[%s6 + $0x38] sm:$0xff]
  %v1536 = vld [vmem:[%s6 + $0x40] sm:$0xff]
  %v1537 = vld [vmem:[%s6 + $0x48] sm:$0xff]
  %v1538 = vld [vmem:[%s6 + $0x50] sm:$0xff]
  %v1539 = vld [vmem:[%s6 + $0x58] sm:$0xff]
  %v1540 = vld [vmem:[%s6 + $0x60] sm:$0xff]
  %v1541 = vld [vmem:[%s6 + $0x68] sm:$0xff]
  %v1542 = vld [vmem:[%s6 + $0x70] sm:$0xff]
  %v1543 = vld [vmem:[%s6 + $0x78] sm:$0xff]
  %v1544 = vld [vmem:[%s7] sm:$0x1]
  %v1546 = vlaneseq
  %v1547 = vshrl.u32 %v1546, 7
  %v1548 = vsub.s32 0, %v1547
  %v1549 = vrot.slane %v1544, %v1548
  %1551 = vmatprep.subr.mxu0 0.0
  %1552 = vmatpush1.msra.mxu0 %v1543
  %1553 = vmatprep.subr.mxu0 0.0
  %1554 = vmatpush1.msra.mxu0 %v1542
  %1555 = vmatprep.subr.mxu0 0.0
  %1556 = vmatpush1.msra.mxu0 %v1541
  %1557 = vmatprep.subr.mxu0 0.0
  %1558 = vmatpush1.msra.mxu0 %v1540
  %1559 = vmatprep.subr.mxu0 0.0
  %1560 = vmatpush1.msra.mxu0 %v1539
  %1561 = vmatprep.subr.mxu0 0.0
  %1562 = vmatpush1.msra.mxu0 %v1538
  %1563 = vmatprep.subr.mxu0 0.0
  %1564 = vmatpush1.msra.mxu0 %v1537
  %1565 = vmatprep.subr.mxu0 0.0
  %1566 = vmatpush1.msra.mxu0 %v1536
  %1567 = vmatprep.subr.mxu0 0.0
  %1568 = vmatpush1.msra.mxu0 %v1535
  %1569 = vmatprep.subr.mxu0 0.0
  %1570 = vmatpush1.msra.mxu0 %v1534
  %1571 = vmatprep.subr.mxu0 0.0
  %1572 = vmatpush1.msra.mxu0 %v1533
  %1573 = vmatprep.subr.mxu0 0.0
  %1574 = vmatpush1.msra.mxu0 %v1532
  %1575 = vmatprep.subr.mxu0 0.0
  %1576 = vmatpush1.msra.mxu0 %v1531
  %1577 = vmatprep.subr.mxu0 0.0
  %1578 = vmatpush1.msra.mxu0 %v1530
  %1579 = vmatprep.subr.mxu0 0.0
  %1580 = vmatpush1.msra.mxu0 %v1529
  %1581 = vmatprep.subr.mxu0 0.0
  %1582 = vmatpush1.msra.mxu0 %v1528
  %1583 = vmatprep.subr.mxu0 0.0
  %1584 = vmatpush2.msra.mxu0 0.0
  %1585 = vmatprep.subr.mxu0 0.0
  %1586 = vmatpush2.msra.mxu0 0.0
  %1587 = vmatprep.subr.mxu0 0.0
  %1588 = vmatpush2.msra.mxu0 0.0
  %1589 = vmatprep.subr.mxu0 0.0
  %1590 = vmatpush2.msra.mxu0 0.0
  %1591 = vmatprep.subr.mxu0 0.0
  %1592 = vmatpush2.msra.mxu0 0.0
  %1593 = vmatprep.subr.mxu0 0.0
  %1594 = vmatpush2.msra.mxu0 0.0
  %1595 = vmatprep.subr.mxu0 0.0
  %1596 = vmatpush2.msra.mxu0 0.0
  %1597 = vmatprep.subr.mxu0 0.0
  %1598 = vmatpush2.msra.mxu0 0.0
  %1599 = vmatprep.subr.mxu0 0.0
  %1600 = vmatpush2.msra.mxu0 0.0
  %1601 = vmatprep.subr.mxu0 0.0
  %1602 = vmatpush2.msra.mxu0 0.0
  %1603 = vmatprep.subr.mxu0 0.0
  %1604 = vmatpush2.msra.mxu0 0.0
  %1605 = vmatprep.subr.mxu0 0.0
  %1606 = vmatpush2.msra.mxu0 0.0
  %1607 = vmatprep.subr.mxu0 0.0
  %1608 = vmatpush2.msra.mxu0 0.0
  %1609 = vmatprep.subr.mxu0 0.0
  %1610 = vmatpush2.msra.mxu0 0.0
  %1611 = vmatprep.subr.mxu0 0.0
  %1612 = vmatpush2.msra.mxu0 0.0
  %1613 = vmatprep.subr.mxu0 0.0
  %1614 = vmatpush2.msra.mxu0 0.0
  %1615 = vmatprep.mubr.f32.mxu0 0.0
  %1616 = vmatmul.mubr.f32.gmra.mxu0 %v1527
  %v1617 = vpop.f32.mrf.mxu0
  %v1618 = vadd.f32 %v1549, %v1617
  %v1619 = vpop.f32.mrf.mxu0
  %1620 = vdwg.mxu0
  %1621 = vst [vmem:[%s8] sm:$0xff] %v1618
  // Predicated region
  $region34: #{lstm_forward.1} parent=0 // pred_check
    _
  $region35: #{lstm_forward.1} parent=0 // pred_check_branch
    %1623 = sbr.rel (0) target = $region37
  $region36: #{lstm_forward.1} parent=0 // pred_region
    _
  $region37: #{lstm_forward.1} parent=0 // pred_fallthru
    _
  // Predicated region
  $region38: #{lstm_forward.1} parent=0 // pred_check
    _
  $region39: #{lstm_forward.1} parent=0 // pred_check_branch
    %1625 = sbr.rel (0) target = $region41
  $region40: #{lstm_forward.1} parent=0 // pred_region
    _
  $region41: #{lstm_forward.1} parent=0 // pred_fallthru
    _

</llo_original>
